<compile_context>
chip_gen: v5e
topology: v5e:2x2
jax: 0.10.0
libtpu: 0.0.40
codegen_flags: <defaults>
</compile_context>

<pallas_src>
import functools

import jax
import jax.numpy as jnp
from jax.experimental import pallas as pl
from jax.experimental.pallas import tpu as pltpu

NODE_TILE = 256                  # adj row/col tile for large N (v6e/v7x MXU-aligned)
LANE_PAD = 128                   # pad feature / hidden dims to full lane width
VMEM_LIMIT = 32 * 1024 * 1024    # explicit scoped-VMEM limit; safe on v5e/v6e/v7x


def _round_up(x, m):
    return (x + m - 1) // m * m


# ---------------------------------------------------------------------------
# Kernel 1: feature transform  xw = h @ W   (row-tiled over nodes)
# ---------------------------------------------------------------------------
def _xw_kernel(h_ref, w_ref, o_ref):
    o_ref[...] = jnp.dot(h_ref[...], w_ref[...],
                         preferred_element_type=jnp.float32).astype(o_ref.dtype)


def _feature_transform(h, w, node_tile):
    n_pad, c_pad = h.shape
    h_pad = w.shape[1]
    grid = (n_pad // node_tile,)
    cost = pl.CostEstimate(
        flops=2 * n_pad * c_pad * h_pad,
        transcendentals=0,
        bytes_accessed=2 * (n_pad * c_pad + c_pad * h_pad + n_pad * h_pad))
    return pl.pallas_call(
        _xw_kernel,
        out_shape=jax.ShapeDtypeStruct((n_pad, h_pad), jnp.bfloat16),
        grid_spec=pltpu.PrefetchScalarGridSpec(
            num_scalar_prefetch=0,
            grid=grid,
            in_specs=[
                pl.BlockSpec((node_tile, c_pad), lambda i: (i, 0)),
                pl.BlockSpec((c_pad, h_pad), lambda i: (0, 0)),   # W stays resident
            ],
            out_specs=pl.BlockSpec((node_tile, h_pad), lambda i: (i, 0))),
        compiler_params=pltpu.CompilerParams(
            dimension_semantics=("parallel",),
            vmem_limit_bytes=VMEM_LIMIT),
        cost_estimate=cost,
    )(h, w)


# ---------------------------------------------------------------------------
# Kernel 2: aggregation  h = act(Ahat @ xw + b)   ((i,k)-tiled, f32 accumulator)
# ---------------------------------------------------------------------------
def _aggregate_kernel(adj_ref, xw_ref, b_ref, o_ref, acc_ref, *, apply_relu):
    k = pl.program_id(1)

    @pl.when(k == 0)
    def _():
        acc_ref[...] = jnp.zeros_like(acc_ref)

    acc_ref[...] += jnp.dot(adj_ref[...], xw_ref[...],
                            preferred_element_type=jnp.float32)

    @pl.when(k == pl.num_programs(1) - 1)
    def _():
        out = acc_ref[...] + b_ref[...]
        if apply_relu:
            out = jnp.maximum(out, 0.0)
        o_ref[...] = out.astype(o_ref.dtype)


def _gcn_aggregate(adj, xw, b, node_tile, *, apply_relu):
    n_pad = adj.shape[0]
    h_pad = xw.shape[1]
    n_tiles = n_pad // node_tile
    grid = (n_tiles, n_tiles)
    cost = pl.CostEstimate(
        flops=2 * n_pad * n_pad * h_pad,
        transcendentals=0,
        bytes_accessed=2 * (n_pad * n_pad + n_tiles * n_pad * h_pad
                            + n_pad * h_pad) + 4 * h_pad)
    return pl.pallas_call(
        functools.partial(_aggregate_kernel, apply_relu=apply_relu),
        out_shape=jax.ShapeDtypeStruct((n_pad, h_pad), jnp.bfloat16),
        grid_spec=pltpu.PrefetchScalarGridSpec(
            num_scalar_prefetch=0,
            grid=grid,
            in_specs=[
                pl.BlockSpec((node_tile, node_tile), lambda i, k: (i, k)),  # stream adj
                pl.BlockSpec((node_tile, h_pad), lambda i, k: (k, 0)),      # stream xw
                pl.BlockSpec((1, h_pad), lambda i, k: (0, 0)),              # bias resident
            ],
            out_specs=pl.BlockSpec((node_tile, h_pad), lambda i, k: (i, 0)),
            scratch_shapes=[pltpu.VMEM((node_tile, h_pad), jnp.float32)]),
        compiler_params=pltpu.CompilerParams(
            dimension_semantics=("parallel", "arbitrary"),
            vmem_limit_bytes=VMEM_LIMIT),
        cost_estimate=cost,
    )(adj, xw, b)


# ---------------------------------------------------------------------------
# Kernel 3: global mean pool + MLP  (reduction sweep over node tiles)
# ---------------------------------------------------------------------------
def _pool_mlp_kernel(pool_ref, h_ref, lw1_ref, lb1_ref, lw2_ref, lb2_ref,
                     o_ref, acc_ref):
    k = pl.program_id(0)

    @pl.when(k == 0)
    def _():
        acc_ref[...] = jnp.zeros_like(acc_ref)

    acc_ref[...] += jnp.dot(pool_ref[...], h_ref[...],
                            preferred_element_type=jnp.float32)

    @pl.when(k == pl.num_programs(0) - 1)
    def _():
        g = acc_ref[...]
        g = jnp.dot(g.astype(jnp.bfloat16), lw1_ref[...],
                    preferred_element_type=jnp.float32) + lb1_ref[...]
        g = jnp.maximum(g, 0.0)
        g = jnp.dot(g.astype(jnp.bfloat16), lw2_ref[...],
                    preferred_element_type=jnp.float32) + lb2_ref[...]
        o_ref[...] = g.astype(o_ref.dtype)


def _pool_mlp(pool, h, lw1, lb1, lw2, lb2, node_tile):
    g_pad, n_pad = pool.shape
    h_pad = h.shape[1]
    n_tiles = n_pad // node_tile
    grid = (n_tiles,)
    cost = pl.CostEstimate(
        flops=2 * g_pad * n_pad * h_pad + 4 * g_pad * h_pad * h_pad,
        transcendentals=0,
        bytes_accessed=2 * (g_pad * n_pad + n_pad * h_pad + 2 * h_pad * h_pad)
                       + 4 * (2 * h_pad + g_pad * h_pad))
    return pl.pallas_call(
        _pool_mlp_kernel,
        out_shape=jax.ShapeDtypeStruct((g_pad, h_pad), jnp.float32),
        grid_spec=pltpu.PrefetchScalarGridSpec(
            num_scalar_prefetch=0,
            grid=grid,
            in_specs=[
                pl.BlockSpec((g_pad, node_tile), lambda k: (0, k)),   # stream pool
                pl.BlockSpec((node_tile, h_pad), lambda k: (k, 0)),   # stream h
                pl.BlockSpec((h_pad, h_pad), lambda k: (0, 0)),       # MLP weights resident
                pl.BlockSpec((1, h_pad), lambda k: (0, 0)),
                pl.BlockSpec((h_pad, h_pad), lambda k: (0, 0)),
                pl.BlockSpec((1, h_pad), lambda k: (0, 0)),
            ],
            out_specs=pl.BlockSpec((g_pad, h_pad), lambda k: (0, 0)),
            scratch_shapes=[pltpu.VMEM((g_pad, h_pad), jnp.float32)]),
        compiler_params=pltpu.CompilerParams(
            dimension_semantics=("arbitrary",),
            vmem_limit_bytes=VMEM_LIMIT),
        cost_estimate=cost,
    )(pool, h, lw1, lb1, lw2, lb2)


# ---------------------------------------------------------------------------
# Wrapper: pad to lane/tile-aligned shapes (bf16 streams, f32 biases), run sweeps.
# ---------------------------------------------------------------------------
@jax.jit
def graph_encoder(adj, x, params, pool):
    (w1, b1, w2, b2, w3, b3, lw1, lb1, lw2, lb2) = params
    n = adj.shape[0]
    c = x.shape[1]
    hidden = w1.shape[1]
    g = pool.shape[0]

    # Generation-friendly tiling: 256 for large N (v6e/v7x MXU), otherwise the
    # smallest 128-multiple that covers N (still lane/MXU aligned on v5e).
    node_tile = NODE_TILE if n >= NODE_TILE else _round_up(max(n, 8), 128)
    n_pad = _round_up(n, node_tile)
    c_pad = _round_up(c, LANE_PAD)
    h_pad = _round_up(hidden, LANE_PAD)
    g_pad = _round_up(g, 8)

    def pad2(a, rows, cols, dtype):
        out = jnp.zeros((rows, cols), dtype)
        return out.at[:a.shape[0], :a.shape[1]].set(a.astype(dtype))

    # Zero-padding is exact: padded adj rows/cols are zero, padded feature
    # columns stay zero through every layer, and pool has zero weight on
    # padded nodes, so the real [:g, :hidden] block is unchanged.
    adj_p = pad2(adj, n_pad, n_pad, jnp.bfloat16)
    x_p = pad2(x, n_pad, c_pad, jnp.bfloat16)
    pool_p = pad2(pool, g_pad, n_pad, jnp.bfloat16)

    w1_p = pad2(w1, c_pad, h_pad, jnp.bfloat16)
    w2_p = pad2(w2, h_pad, h_pad, jnp.bfloat16)
    w3_p = pad2(w3, h_pad, h_pad, jnp.bfloat16)
    lw1_p = pad2(lw1, h_pad, h_pad, jnp.bfloat16)
    lw2_p = pad2(lw2, h_pad, h_pad, jnp.bfloat16)
    b1_p = pad2(b1, 1, h_pad, jnp.float32)
    b2_p = pad2(b2, 1, h_pad, jnp.float32)
    b3_p = pad2(b3, 1, h_pad, jnp.float32)
    lb1_p = pad2(lb1, 1, h_pad, jnp.float32)
    lb2_p = pad2(lb2, 1, h_pad, jnp.float32)

    # conv1 + relu
    h = _gcn_aggregate(adj_p, _feature_transform(x_p, w1_p, node_tile),
                       b1_p, node_tile, apply_relu=True)
    # dropout(p=0.1) -> identity in eval mode
    # TODO(synk): training-mode dropout (pltpu.prng_seed/prng_random_bits mask) not emitted.
    # conv2 + relu
    h = _gcn_aggregate(adj_p, _feature_transform(h, w2_p, node_tile),
                       b2_p, node_tile, apply_relu=True)
    # conv3 (no activation)
    h = _gcn_aggregate(adj_p, _feature_transform(h, w3_p, node_tile),
                       b3_p, node_tile, apply_relu=False)
    # global mean pool + MLP
    out = _pool_mlp(pool_p, h, lw1_p, lb1_p, lw2_p, lb2_p, node_tile)
    return out[:g, :hidden]


# ---------------------------------------------------------------------------
# Graph preprocessing glue (plain JAX, matches GCNConv normalization & mean pool)
# ---------------------------------------------------------------------------
def build_gcn_adjacency(edge_index, num_nodes):
    """Dense Ahat = D^{-1/2} (A + I) D^{-1/2} from a [2, E] edge_index."""
    src, dst = edge_index[0], edge_index[1]
    adj = jnp.zeros((num_nodes, num_nodes), jnp.float32)
    adj = adj.at[dst, src].add(1.0)                      # sum duplicate edges (PyG behavior)
    adj = adj + jnp.eye(num_nodes, dtype=jnp.float32)    # self loops
    deg = adj.sum(axis=1)
    d_inv_sqrt = jnp.where(deg > 0, 1.0 / jnp.sqrt(deg), 0.0)
    return d_inv_sqrt[:, None] * adj * d_inv_sqrt[None, :]


def build_mean_pool(batch, num_graphs):
    """Pooling matrix P [G, N] implementing global_mean_pool."""
    onehot = (batch[None, :] == jnp.arange(num_graphs)[:, None]).astype(jnp.float32)
    counts = onehot.sum(axis=1, keepdims=True)
    return onehot / jnp.maximum(counts, 1.0)


if __name__ == "__main__":
    # Small synthetic problem: 2 graphs of 8 nodes each (N=16), in_channels=8, hidden=32.
    num_nodes = 16
    in_channels = 8
    hidden = 32
    num_graphs = 2

    key = jax.random.PRNGKey(0)
    keys = jax.random.split(key, 12)

    x = jax.random.normal(keys[0], (num_nodes, in_channels), jnp.float32)

    # Deterministic edge_index: a ring inside each graph (both directions).
    edges = []
    nodes_per_graph = num_nodes // num_graphs
    for gidx in range(num_graphs):
        base = gidx * nodes_per_graph
        for i in range(nodes_per_graph):
            a = base + i
            b = base + (i + 1) % nodes_per_graph
            edges.append((a, b))
            edges.append((b, a))
    edge_index = jnp.array(edges, dtype=jnp.int32).T  # [2, E]

    batch = jnp.repeat(jnp.arange(num_graphs, dtype=jnp.int32), nodes_per_graph)

    def winit(k, fan_in, fan_out):
        scale = 1.0 / jnp.sqrt(jnp.float32(fan_in))
        return jax.random.uniform(k, (fan_in, fan_out), jnp.float32, -scale, scale)

    w1 = winit(keys[1], in_channels, hidden); b1 = jnp.zeros((1, hidden), jnp.float32)
    w2 = winit(keys[2], hidden, hidden);      b2 = jnp.zeros((1, hidden), jnp.float32)
    w3 = winit(keys[3], hidden, hidden);      b3 = jnp.zeros((1, hidden), jnp.float32)
    lw1 = winit(keys[4], hidden, hidden)
    lb1 = jax.random.uniform(keys[5], (1, hidden), jnp.float32,
                             -1.0 / jnp.sqrt(hidden), 1.0 / jnp.sqrt(hidden))
    lw2 = winit(keys[6], hidden, hidden)
    lb2 = jax.random.uniform(keys[7], (1, hidden), jnp.float32,
                             -1.0 / jnp.sqrt(hidden), 1.0 / jnp.sqrt(hidden))

    params = (w1, b1, w2, b2, w3, b3, lw1, lb1, lw2, lb2)

    adj = build_gcn_adjacency(edge_index, num_nodes)
    pool = build_mean_pool(batch, num_graphs)

    out = graph_encoder(adj, x, params, pool)
    out = jax.block_until_ready(out)

    # Reference that mirrors the kernel's bf16 storage / f32-accumulation points.
    def r(a):  # round-trip through bf16 (matches where the kernel stores bf16)
        return a.astype(jnp.bfloat16).astype(jnp.float32)

    def ref(adj, x):
        adj_b = r(adj)
        def conv(h_b, w, bias, relu):
            xw = r(h_b @ r(w))
            o = adj_b @ xw + bias
            if relu:
                o = jnp.maximum(o, 0.0)
            return r(o)
        h = conv(r(x), w1, b1, True)
        h = conv(h, w2, b2, True)
        h = conv(h, w3, b3, False)
        g = r(pool) @ h
        g = jnp.maximum(r(g) @ r(lw1) + lb1, 0.0)
        return r(g) @ r(lw2) + lb2

    expected = ref(adj, x)
    assert out.shape == (num_graphs, hidden)
    assert jnp.allclose(out, expected, atol=1e-2, rtol=1e-2), (
        f"max abs err {jnp.max(jnp.abs(out - expected))}")

    print("KERNEL_OK")
</pallas_src>

<mosaic_0001>
module attributes {stable_mosaic.version = 11 : i64} {
  func.func @_xw_kernel(%arg0: i32, %arg1: memref<128x128xbf16, #tpu.memory_space<vmem>>, %arg2: memref<128x128xbf16, #tpu.memory_space<vmem>>, %arg3: memref<128x128xbf16, #tpu.memory_space<vmem>>) attributes {dimension_semantics = [#tpu.dimension_semantics<parallel>], iteration_bounds = array<i64: 1>, scalar_prefetch = 0 : i64, scratch_operands = 0 : i64, tpu.core_type = #tpu.core_type<tc>, window_params = [{transform_indices = @transform_0, window_bounds = array<i64: 128, 128>}, {pipeline_mode = #tpu.pipeline_mode<synchronous>, transform_indices = @transform_1, window_bounds = array<i64: 128, 128>}, {transform_indices = @transform_2, window_bounds = array<i64: 128, 128>}]} {
    %c0 = arith.constant 0 : index
    %c0_0 = arith.constant 0 : index
    %0 = vector.load %arg1[%c0, %c0_0] : memref<128x128xbf16, #tpu.memory_space<vmem>>, vector<128x128xbf16>
    %c0_1 = arith.constant 0 : index
    %c0_2 = arith.constant 0 : index
    %1 = vector.load %arg2[%c0_1, %c0_2] : memref<128x128xbf16, #tpu.memory_space<vmem>>, vector<128x128xbf16>
    %cst = arith.constant dense<0.000000e+00> : vector<128x128xf32>
    %2 = tpu.matmul %0, %1, %cst {dimension_numbers = #tpu.dot_dimension_numbers<[1], [0], [0], [1], [0, 0, 1, 1], [], []>} : vector<128x128xbf16>, vector<128x128xbf16>, vector<128x128xf32> -> vector<128x128xf32>
    %3 = arith.truncf %2 : vector<128x128xf32> to vector<128x128xbf16>
    %c0_3 = arith.constant 0 : index
    %c0_4 = arith.constant 0 : index
    %4 = vector.load %arg3[%c0_3, %c0_4] : memref<128x128xbf16, #tpu.memory_space<vmem>>, vector<128x128xbf16>
    tpu.vector_store %arg3[%c0_3, %c0_4], %3 {strides = array<i32>} : memref<128x128xbf16, #tpu.memory_space<vmem>>, vector<128x128xbf16>,
    return
  }
  func.func @transform_0(%arg0: i32) -> (i32, i32) {
    %c0_i32 = arith.constant 0 : i32
    %c0_i32_0 = arith.constant 0 : i32
    return %arg0, %c0_i32 : i32, i32
  }
  func.func @transform_1(%arg0: i32) -> (i32, i32) {
    %c0_i32 = arith.constant 0 : i32
    %c0_i32_0 = arith.constant 0 : i32
    %c0_i32_1 = arith.constant 0 : i32
    return %c0_i32, %c0_i32_0 : i32, i32
  }
  func.func @transform_2(%arg0: i32) -> (i32, i32) {
    %c0_i32 = arith.constant 0 : i32
    %c0_i32_0 = arith.constant 0 : i32
    return %arg0, %c0_i32 : i32, i32
  }
}

module attributes {stable_mosaic.version = 11 : i64} {
  func.func @_aggregate_kernel(%arg0: i32, %arg1: i32, %arg2: memref<128x128xbf16, #tpu.memory_space<vmem>>, %arg3: memref<128x128xbf16, #tpu.memory_space<vmem>>, %arg4: memref<1x128xf32, #tpu.memory_space<vmem>>, %arg5: memref<128x128xbf16, #tpu.memory_space<vmem>>, %arg6: memref<128x128xf32, #tpu.memory_space<vmem>>) attributes {dimension_semantics = [#tpu.dimension_semantics<parallel>, #tpu.dimension_semantics<arbitrary>], iteration_bounds = array<i64: 1, 1>, scalar_prefetch = 0 : i64, scratch_operands = 1 : i64, tpu.core_type = #tpu.core_type<tc>, window_params = [{transform_indices = @transform_0, window_bounds = array<i64: 128, 128>}, {transform_indices = @transform_1, window_bounds = array<i64: 128, 128>}, {pipeline_mode = #tpu.pipeline_mode<synchronous>, transform_indices = @transform_2, window_bounds = array<i64: 1, 128>}, {transform_indices = @transform_3, window_bounds = array<i64: 128, 128>}]} {
    %c0_i32 = arith.constant 0 : i32
    %0 = arith.cmpi eq, %arg1, %c0_i32 : i32
    %1 = arith.extui %0 : i1 to i32
    %c0_i32_0 = arith.constant 0 : i32
    %2 = arith.cmpi ne, %1, %c0_i32_0 : i32
    scf.if %2 {
      %cst_10 = arith.constant 0.000000e+00 : f32
      %12 = vector.broadcast %cst_10 : f32 to vector<128x128xf32>
      %c0_11 = arith.constant 0 : index
      %c0_12 = arith.constant 0 : index
      %13 = vector.load %arg6[%c0_11, %c0_12] : memref<128x128xf32, #tpu.memory_space<vmem>>, vector<128x128xf32>
      tpu.vector_store %arg6[%c0_11, %c0_12], %12 {strides = array<i32>} : memref<128x128xf32, #tpu.memory_space<vmem>>, vector<128x128xf32>,
    } else {
    }
    %c0 = arith.constant 0 : index
    %c0_1 = arith.constant 0 : index
    %3 = vector.load %arg6[%c0, %c0_1] : memref<128x128xf32, #tpu.memory_space<vmem>>, vector<128x128xf32>
    %c0_2 = arith.constant 0 : index
    %c0_3 = arith.constant 0 : index
    %4 = vector.load %arg2[%c0_2, %c0_3] : memref<128x128xbf16, #tpu.memory_space<vmem>>, vector<128x128xbf16>
    %c0_4 = arith.constant 0 : index
    %c0_5 = arith.constant 0 : index
    %5 = vector.load %arg3[%c0_4, %c0_5] : memref<128x128xbf16, #tpu.memory_space<vmem>>, vector<128x128xbf16>
    %cst = arith.constant dense<0.000000e+00> : vector<128x128xf32>
    %6 = tpu.matmul %4, %5, %cst {dimension_numbers = #tpu.dot_dimension_numbers<[1], [0], [0], [1], [0, 0, 1, 1], [], []>} : vector<128x128xbf16>, vector<128x128xbf16>, vector<128x128xf32> -> vector<128x128xf32>
    %7 = arith.addf %3, %6 : vector<128x128xf32>
    %c0_6 = arith.constant 0 : index
    %c0_7 = arith.constant 0 : index
    %8 = vector.load %arg6[%c0_6, %c0_7] : memref<128x128xf32, #tpu.memory_space<vmem>>, vector<128x128xf32>
    tpu.vector_store %arg6[%c0_6, %c0_7], %7 {strides = array<i32>} : memref<128x128xf32, #tpu.memory_space<vmem>>, vector<128x128xf32>,
    %c0_i32_8 = arith.constant 0 : i32
    %9 = arith.cmpi eq, %arg1, %c0_i32_8 : i32
    %10 = arith.extui %9 : i1 to i32
    %c0_i32_9 = arith.constant 0 : i32
    %11 = arith.cmpi ne, %10, %c0_i32_9 : i32
    scf.if %11 {
      %c0_10 = arith.constant 0 : index
      %c0_11 = arith.constant 0 : index
      %12 = vector.load %arg6[%c0_10, %c0_11] : memref<128x128xf32, #tpu.memory_space<vmem>>, vector<128x128xf32>
      %c0_12 = arith.constant 0 : index
      %c0_13 = arith.constant 0 : index
      %13 = vector.load %arg4[%c0_12, %c0_13] : memref<1x128xf32, #tpu.memory_space<vmem>>, vector<1x128xf32>
      %14 = vector.broadcast %13 : vector<1x128xf32> to vector<128x128xf32>
      %15 = arith.addf %12, %14 : vector<128x128xf32>
      %cst_14 = arith.constant 0.000000e+00 : f32
      %16 = vector.broadcast %cst_14 : f32 to vector<128x128xf32>
      %17 = arith.maximumf %15, %16 : vector<128x128xf32>
      %18 = arith.truncf %17 : vector<128x128xf32> to vector<128x128xbf16>
      %c0_15 = arith.constant 0 : index
      %c0_16 = arith.constant 0 : index
      %19 = vector.load %arg5[%c0_15, %c0_16] : memref<128x128xbf16, #tpu.memory_space<vmem>>, vector<128x128xbf16>
      tpu.vector_store %arg5[%c0_15, %c0_16], %18 {strides = array<i32>} : memref<128x128xbf16, #tpu.memory_space<vmem>>, vector<128x128xbf16>,
    } else {
    }
    return
  }
  func.func @transform_0(%arg0: i32, %arg1: i32) -> (i32, i32) {
    %c0_i32 = arith.constant 0 : i32
    return %arg0, %arg1 : i32, i32
  }
  func.func @transform_1(%arg0: i32, %arg1: i32) -> (i32, i32) {
    %c0_i32 = arith.constant 0 : i32
    %c0_i32_0 = arith.constant 0 : i32
    return %arg1, %c0_i32 : i32, i32
  }
  func.func @transform_2(%arg0: i32, %arg1: i32) -> (i32, i32) {
    %c0_i32 = arith.constant 0 : i32
    %c0_i32_0 = arith.constant 0 : i32
    %c0_i32_1 = arith.constant 0 : i32
    return %c0_i32, %c0_i32_0 : i32, i32
  }
  func.func @transform_3(%arg0: i32, %arg1: i32) -> (i32, i32) {
    %c0_i32 = arith.constant 0 : i32
    %c0_i32_0 = arith.constant 0 : i32
    return %arg0, %c0_i32 : i32, i32
  }
}

module attributes {stable_mosaic.version = 11 : i64} {
  func.func @_aggregate_kernel(%arg0: i32, %arg1: i32, %arg2: memref<128x128xbf16, #tpu.memory_space<vmem>>, %arg3: memref<128x128xbf16, #tpu.memory_space<vmem>>, %arg4: memref<1x128xf32, #tpu.memory_space<vmem>>, %arg5: memref<128x128xbf16, #tpu.memory_space<vmem>>, %arg6: memref<128x128xf32, #tpu.memory_space<vmem>>) attributes {dimension_semantics = [#tpu.dimension_semantics<parallel>, #tpu.dimension_semantics<arbitrary>], iteration_bounds = array<i64: 1, 1>, scalar_prefetch = 0 : i64, scratch_operands = 1 : i64, tpu.core_type = #tpu.core_type<tc>, window_params = [{transform_indices = @transform_0, window_bounds = array<i64: 128, 128>}, {transform_indices = @transform_1, window_bounds = array<i64: 128, 128>}, {pipeline_mode = #tpu.pipeline_mode<synchronous>, transform_indices = @transform_2, window_bounds = array<i64: 1, 128>}, {transform_indices = @transform_3, window_bounds = array<i64: 128, 128>}]} {
    %c0_i32 = arith.constant 0 : i32
    %0 = arith.cmpi eq, %arg1, %c0_i32 : i32
    %1 = arith.extui %0 : i1 to i32
    %c0_i32_0 = arith.constant 0 : i32
    %2 = arith.cmpi ne, %1, %c0_i32_0 : i32
    scf.if %2 {
      %cst_10 = arith.constant 0.000000e+00 : f32
      %12 = vector.broadcast %cst_10 : f32 to vector<128x128xf32>
      %c0_11 = arith.constant 0 : index
      %c0_12 = arith.constant 0 : index
      %13 = vector.load %arg6[%c0_11, %c0_12] : memref<128x128xf32, #tpu.memory_space<vmem>>, vector<128x128xf32>
      tpu.vector_store %arg6[%c0_11, %c0_12], %12 {strides = array<i32>} : memref<128x128xf32, #tpu.memory_space<vmem>>, vector<128x128xf32>,
    } else {
    }
    %c0 = arith.constant 0 : index
    %c0_1 = arith.constant 0 : index
    %3 = vector.load %arg6[%c0, %c0_1] : memref<128x128xf32, #tpu.memory_space<vmem>>, vector<128x128xf32>
    %c0_2 = arith.constant 0 : index
    %c0_3 = arith.constant 0 : index
    %4 = vector.load %arg2[%c0_2, %c0_3] : memref<128x128xbf16, #tpu.memory_space<vmem>>, vector<128x128xbf16>
    %c0_4 = arith.constant 0 : index
    %c0_5 = arith.constant 0 : index
    %5 = vector.load %arg3[%c0_4, %c0_5] : memref<128x128xbf16, #tpu.memory_space<vmem>>, vector<128x128xbf16>
    %cst = arith.constant dense<0.000000e+00> : vector<128x128xf32>
    %6 = tpu.matmul %4, %5, %cst {dimension_numbers = #tpu.dot_dimension_numbers<[1], [0], [0], [1], [0, 0, 1, 1], [], []>} : vector<128x128xbf16>, vector<128x128xbf16>, vector<128x128xf32> -> vector<128x128xf32>
    %7 = arith.addf %3, %6 : vector<128x128xf32>
    %c0_6 = arith.constant 0 : index
    %c0_7 = arith.constant 0 : index
    %8 = vector.load %arg6[%c0_6, %c0_7] : memref<128x128xf32, #tpu.memory_space<vmem>>, vector<128x128xf32>
    tpu.vector_store %arg6[%c0_6, %c0_7], %7 {strides = array<i32>} : memref<128x128xf32, #tpu.memory_space<vmem>>, vector<128x128xf32>,
    %c0_i32_8 = arith.constant 0 : i32
    %9 = arith.cmpi eq, %arg1, %c0_i32_8 : i32
    %10 = arith.extui %9 : i1 to i32
    %c0_i32_9 = arith.constant 0 : i32
    %11 = arith.cmpi ne, %10, %c0_i32_9 : i32
    scf.if %11 {
      %c0_10 = arith.constant 0 : index
      %c0_11 = arith.constant 0 : index
      %12 = vector.load %arg6[%c0_10, %c0_11] : memref<128x128xf32, #tpu.memory_space<vmem>>, vector<128x128xf32>
      %c0_12 = arith.constant 0 : index
      %c0_13 = arith.constant 0 : index
      %13 = vector.load %arg4[%c0_12, %c0_13] : memref<1x128xf32, #tpu.memory_space<vmem>>, vector<1x128xf32>
      %14 = vector.broadcast %13 : vector<1x128xf32> to vector<128x128xf32>
      %15 = arith.addf %12, %14 : vector<128x128xf32>
      %16 = arith.truncf %15 : vector<128x128xf32> to vector<128x128xbf16>
      %c0_14 = arith.constant 0 : index
      %c0_15 = arith.constant 0 : index
      %17 = vector.load %arg5[%c0_14, %c0_15] : memref<128x128xbf16, #tpu.memory_space<vmem>>, vector<128x128xbf16>
      tpu.vector_store %arg5[%c0_14, %c0_15], %16 {strides = array<i32>} : memref<128x128xbf16, #tpu.memory_space<vmem>>, vector<128x128xbf16>,
    } else {
    }
    return
  }
  func.func @transform_0(%arg0: i32, %arg1: i32) -> (i32, i32) {
    %c0_i32 = arith.constant 0 : i32
    return %arg0, %arg1 : i32, i32
  }
  func.func @transform_1(%arg0: i32, %arg1: i32) -> (i32, i32) {
    %c0_i32 = arith.constant 0 : i32
    %c0_i32_0 = arith.constant 0 : i32
    return %arg1, %c0_i32 : i32, i32
  }
  func.func @transform_2(%arg0: i32, %arg1: i32) -> (i32, i32) {
    %c0_i32 = arith.constant 0 : i32
    %c0_i32_0 = arith.constant 0 : i32
    %c0_i32_1 = arith.constant 0 : i32
    return %c0_i32, %c0_i32_0 : i32, i32
  }
  func.func @transform_3(%arg0: i32, %arg1: i32) -> (i32, i32) {
    %c0_i32 = arith.constant 0 : i32
    %c0_i32_0 = arith.constant 0 : i32
    return %arg0, %c0_i32 : i32, i32
  }
}

module attributes {stable_mosaic.version = 11 : i64} {
  func.func @_pool_mlp_kernel(%arg0: i32, %arg1: memref<8x128xbf16, #tpu.memory_space<vmem>>, %arg2: memref<128x128xbf16, #tpu.memory_space<vmem>>, %arg3: memref<128x128xbf16, #tpu.memory_space<vmem>>, %arg4: memref<1x128xf32, #tpu.memory_space<vmem>>, %arg5: memref<128x128xbf16, #tpu.memory_space<vmem>>, %arg6: memref<1x128xf32, #tpu.memory_space<vmem>>, %arg7: memref<8x128xf32, #tpu.memory_space<vmem>>, %arg8: memref<8x128xf32, #tpu.memory_space<vmem>>) attributes {dimension_semantics = [#tpu.dimension_semantics<arbitrary>], iteration_bounds = array<i64: 1>, scalar_prefetch = 0 : i64, scratch_operands = 1 : i64, tpu.core_type = #tpu.core_type<tc>, window_params = [{transform_indices = @transform_0, window_bounds = array<i64: 8, 128>}, {transform_indices = @transform_1, window_bounds = array<i64: 128, 128>}, {pipeline_mode = #tpu.pipeline_mode<synchronous>, transform_indices = @transform_2, window_bounds = array<i64: 128, 128>}, {pipeline_mode = #tpu.pipeline_mode<synchronous>, transform_indices = @transform_3, window_bounds = array<i64: 1, 128>}, {pipeline_mode = #tpu.pipeline_mode<synchronous>, transform_indices = @transform_4, window_bounds = array<i64: 128, 128>}, {pipeline_mode = #tpu.pipeline_mode<synchronous>, transform_indices = @transform_5, window_bounds = array<i64: 1, 128>}, {pipeline_mode = #tpu.pipeline_mode<synchronous>, transform_indices = @transform_6, window_bounds = array<i64: 8, 128>}]} {
    %c0_i32 = arith.constant 0 : i32
    %0 = arith.cmpi eq, %arg0, %c0_i32 : i32
    %1 = arith.extui %0 : i1 to i32
    %c0_i32_0 = arith.constant 0 : i32
    %2 = arith.cmpi ne, %1, %c0_i32_0 : i32
    scf.if %2 {
      %cst_10 = arith.constant 0.000000e+00 : f32
      %12 = vector.broadcast %cst_10 : f32 to vector<8x128xf32>
      %c0_11 = arith.constant 0 : index
      %c0_12 = arith.constant 0 : index
      %13 = vector.load %arg8[%c0_11, %c0_12] : memref<8x128xf32, #tpu.memory_space<vmem>>, vector<8x128xf32>
      tpu.vector_store %arg8[%c0_11, %c0_12], %12 {strides = array<i32>} : memref<8x128xf32, #tpu.memory_space<vmem>>, vector<8x128xf32>,
    } else {
    }
    %c0 = arith.constant 0 : index
    %c0_1 = arith.constant 0 : index
    %3 = vector.load %arg8[%c0, %c0_1] : memref<8x128xf32, #tpu.memory_space<vmem>>, vector<8x128xf32>
    %c0_2 = arith.constant 0 : index
    %c0_3 = arith.constant 0 : index
    %4 = vector.load %arg1[%c0_2, %c0_3] : memref<8x128xbf16, #tpu.memory_space<vmem>>, vector<8x128xbf16>
    %c0_4 = arith.constant 0 : index
    %c0_5 = arith.constant 0 : index
    %5 = vector.load %arg2[%c0_4, %c0_5] : memref<128x128xbf16, #tpu.memory_space<vmem>>, vector<128x128xbf16>
    %cst = arith.constant dense<0.000000e+00> : vector<8x128xf32>
    %6 = tpu.matmul %4, %5, %cst {dimension_numbers = #tpu.dot_dimension_numbers<[1], [0], [0], [1], [0, 0, 1, 1], [], []>} : vector<8x128xbf16>, vector<128x128xbf16>, vector<8x128xf32> -> vector<8x128xf32>
    %7 = arith.addf %3, %6 : vector<8x128xf32>
    %c0_6 = arith.constant 0 : index
    %c0_7 = arith.constant 0 : index
    %8 = vector.load %arg8[%c0_6, %c0_7] : memref<8x128xf32, #tpu.memory_space<vmem>>, vector<8x128xf32>
    tpu.vector_store %arg8[%c0_6, %c0_7], %7 {strides = array<i32>} : memref<8x128xf32, #tpu.memory_space<vmem>>, vector<8x128xf32>,
    %c0_i32_8 = arith.constant 0 : i32
    %9 = arith.cmpi eq, %arg0, %c0_i32_8 : i32
    %10 = arith.extui %9 : i1 to i32
    %c0_i32_9 = arith.constant 0 : i32
    %11 = arith.cmpi ne, %10, %c0_i32_9 : i32
    scf.if %11 {
      %c0_10 = arith.constant 0 : index
      %c0_11 = arith.constant 0 : index
      %12 = vector.load %arg8[%c0_10, %c0_11] : memref<8x128xf32, #tpu.memory_space<vmem>>, vector<8x128xf32>
      %13 = arith.truncf %12 : vector<8x128xf32> to vector<8x128xbf16>
      %c0_12 = arith.constant 0 : index
      %c0_13 = arith.constant 0 : index
      %14 = vector.load %arg3[%c0_12, %c0_13] : memref<128x128xbf16, #tpu.memory_space<vmem>>, vector<128x128xbf16>
      %cst_14 = arith.constant dense<0.000000e+00> : vector<8x128xf32>
      %15 = tpu.matmul %13, %14, %cst_14 {dimension_numbers = #tpu.dot_dimension_numbers<[1], [0], [0], [1], [0, 0, 1, 1], [], []>} : vector<8x128xbf16>, vector<128x128xbf16>, vector<8x128xf32> -> vector<8x128xf32>
      %c0_15 = arith.constant 0 : index
      %c0_16 = arith.constant 0 : index
      %16 = vector.load %arg4[%c0_15, %c0_16] : memref<1x128xf32, #tpu.memory_space<vmem>>, vector<1x128xf32>
      %17 = vector.broadcast %16 : vector<1x128xf32> to vector<8x128xf32>
      %18 = arith.addf %15, %17 : vector<8x128xf32>
      %cst_17 = arith.constant 0.000000e+00 : f32
      %19 = vector.broadcast %cst_17 : f32 to vector<8x128xf32>
      %20 = arith.maximumf %18, %19 : vector<8x128xf32>
      %21 = arith.truncf %20 : vector<8x128xf32> to vector<8x128xbf16>
      %c0_18 = arith.constant 0 : index
      %c0_19 = arith.constant 0 : index
      %22 = vector.load %arg5[%c0_18, %c0_19] : memref<128x128xbf16, #tpu.memory_space<vmem>>, vector<128x128xbf16>
      %cst_20 = arith.constant dense<0.000000e+00> : vector<8x128xf32>
      %23 = tpu.matmul %21, %22, %cst_20 {dimension_numbers = #tpu.dot_dimension_numbers<[1], [0], [0], [1], [0, 0, 1, 1], [], []>} : vector<8x128xbf16>, vector<128x128xbf16>, vector<8x128xf32> -> vector<8x128xf32>
      %c0_21 = arith.constant 0 : index
      %c0_22 = arith.constant 0 : index
      %24 = vector.load %arg6[%c0_21, %c0_22] : memref<1x128xf32, #tpu.memory_space<vmem>>, vector<1x128xf32>
      %25 = vector.broadcast %24 : vector<1x128xf32> to vector<8x128xf32>
      %26 = arith.addf %23, %25 : vector<8x128xf32>
      %c0_23 = arith.constant 0 : index
      %c0_24 = arith.constant 0 : index
      %27 = vector.load %arg7[%c0_23, %c0_24] : memref<8x128xf32, #tpu.memory_space<vmem>>, vector<8x128xf32>
      tpu.vector_store %arg7[%c0_23, %c0_24], %26 {strides = array<i32>} : memref<8x128xf32, #tpu.memory_space<vmem>>, vector<8x128xf32>,
    } else {
    }
    return
  }
  func.func @transform_0(%arg0: i32) -> (i32, i32) {
    %c0_i32 = arith.constant 0 : i32
    %c0_i32_0 = arith.constant 0 : i32
    return %c0_i32, %arg0 : i32, i32
  }
  func.func @transform_1(%arg0: i32) -> (i32, i32) {
    %c0_i32 = arith.constant 0 : i32
    %c0_i32_0 = arith.constant 0 : i32
    return %arg0, %c0_i32 : i32, i32
  }
  func.func @transform_2(%arg0: i32) -> (i32, i32) {
    %c0_i32 = arith.constant 0 : i32
    %c0_i32_0 = arith.constant 0 : i32
    %c0_i32_1 = arith.constant 0 : i32
    return %c0_i32, %c0_i32_0 : i32, i32
  }
  func.func @transform_3(%arg0: i32) -> (i32, i32) {
    %c0_i32 = arith.constant 0 : i32
    %c0_i32_0 = arith.constant 0 : i32
    %c0_i32_1 = arith.constant 0 : i32
    return %c0_i32, %c0_i32_0 : i32, i32
  }
  func.func @transform_4(%arg0: i32) -> (i32, i32) {
    %c0_i32 = arith.constant 0 : i32
    %c0_i32_0 = arith.constant 0 : i32
    %c0_i32_1 = arith.constant 0 : i32
    return %c0_i32, %c0_i32_0 : i32, i32
  }
  func.func @transform_5(%arg0: i32) -> (i32, i32) {
    %c0_i32 = arith.constant 0 : i32
    %c0_i32_0 = arith.constant 0 : i32
    %c0_i32_1 = arith.constant 0 : i32
    return %c0_i32, %c0_i32_0 : i32, i32
  }
  func.func @transform_6(%arg0: i32) -> (i32, i32) {
    %c0_i32 = arith.constant 0 : i32
    %c0_i32_0 = arith.constant 0 : i32
    %c0_i32_1 = arith.constant 0 : i32
    return %c0_i32, %c0_i32_0 : i32, i32
  }
}

</mosaic_0001>

<llo_original>
// kernel: graph_encoder.7
$region0: #{graph_encoder.7}
  #allocation0 [shape = 'u32[]', space=smem, size = 0x4, offset = 0x4, fixed_abs, tag = 'smem constant byte address 0x4 - core index']
  #allocation1 [shape = 'u32[72,128]{1,0:T(1,128)}', space=vmem, size = 0x9000, scoped, tag = 'internal scratch']
  %s0 = inlined_call_operand.vmem [shape: bf16[128,128], index: 0, kind: input, shape index: {}]
  %s1 = inlined_call_operand.vmem [shape: bf16[128,128], index: 1, kind: input, shape index: {}]
  %s2 = inlined_call_operand.vmem [shape: bf16[128,128], index: 2, kind: output, shape index: {}]
  %s3 = sld [smem:[#allocation0]]
  $region18: #{graph_encoder.7} parent=0
    _
  %s5 = ssub.s32 1, %s3
  %s6 = scalar_select 0, %s5, %s3
  // Predicated region
  $region2: #{graph_encoder.7} parent=0 // pred_check
    _
  $region3: #{graph_encoder.7} parent=0 // pred_check_branch
    %8 = sbr.rel (0) target = $region5
  $region4: #{graph_encoder.7} parent=0 // pred_region
    _
  $region5: #{graph_encoder.7} parent=0 // pred_fallthru
    _
  // Predicated region
  $region6: #{graph_encoder.7} parent=0 // pred_check
    _
  $region7: #{graph_encoder.7} parent=0 // pred_check_branch
    %10 = sbr.rel (0) target = $region9
  $region8: #{graph_encoder.7} parent=0 // pred_region
    _
  $region9: #{graph_encoder.7} parent=0 // pred_fallthru
    _
  %v11 = vld [vmem:[%s0] sm:$0xf]
  %v12 = vld [vmem:[%s0 + $0x4] sm:$0xf]
  %v13 = vld [vmem:[%s0 + $0x8] sm:$0xf]
  %v14 = vld [vmem:[%s0 + $0xc] sm:$0xf]
  %v15 = vld [vmem:[%s0 + $0x10] sm:$0xf]
  %v16 = vld [vmem:[%s0 + $0x14] sm:$0xf]
  %v17 = vld [vmem:[%s0 + $0x18] sm:$0xf]
  %v18 = vld [vmem:[%s0 + $0x1c] sm:$0xf]
  %v19 = vld [vmem:[%s0 + $0x20] sm:$0xf]
  %v20 = vld [vmem:[%s0 + $0x24] sm:$0xf]
  %v21 = vld [vmem:[%s0 + $0x28] sm:$0xf]
  %v22 = vld [vmem:[%s0 + $0x2c] sm:$0xf]
  %v23 = vld [vmem:[%s0 + $0x30] sm:$0xf]
  %v24 = vld [vmem:[%s0 + $0x34] sm:$0xf]
  %v25 = vld [vmem:[%s0 + $0x38] sm:$0xf]
  %v26 = vld [vmem:[%s0 + $0x3c] sm:$0xf]
  %v27 = vld [vmem:[%s1] sm:$0xf]
  %v28 = vld [vmem:[%s1 + $0x4] sm:$0xf]
  %v29 = vld [vmem:[%s1 + $0x8] sm:$0xf]
  %v30 = vld [vmem:[%s1 + $0xc] sm:$0xf]
  %v31 = vld [vmem:[%s1 + $0x10] sm:$0xf]
  %v32 = vld [vmem:[%s1 + $0x14] sm:$0xf]
  %v33 = vld [vmem:[%s1 + $0x18] sm:$0xf]
  %v34 = vld [vmem:[%s1 + $0x1c] sm:$0xf]
  %v35 = vld [vmem:[%s1 + $0x20] sm:$0xf]
  %v36 = vld [vmem:[%s1 + $0x24] sm:$0xf]
  %v37 = vld [vmem:[%s1 + $0x28] sm:$0xf]
  %v38 = vld [vmem:[%s1 + $0x2c] sm:$0xf]
  %v39 = vld [vmem:[%s1 + $0x30] sm:$0xf]
  %v40 = vld [vmem:[%s1 + $0x34] sm:$0xf]
  %v41 = vld [vmem:[%s1 + $0x38] sm:$0xf]
  %v42 = vld [vmem:[%s1 + $0x3c] sm:$0xf]
  %v59 = vunpack.c.l.b16 %v11
  %v60 = vunpack.c.l.b16 %v12
  %v61 = vunpack.c.l.b16 %v13
  %v62 = vunpack.c.l.b16 %v14
  %v63 = vunpack.c.l.b16 %v15
  %v64 = vunpack.c.l.b16 %v16
  %v65 = vunpack.c.l.b16 %v17
  %v66 = vunpack.c.l.b16 %v18
  %v67 = vunpack.c.l.b16 %v19
  %v68 = vunpack.c.l.b16 %v20
  %v69 = vunpack.c.l.b16 %v21
  %v70 = vunpack.c.l.b16 %v22
  %v71 = vunpack.c.l.b16 %v23
  %v72 = vunpack.c.l.b16 %v24
  %v73 = vunpack.c.l.b16 %v25
  %v74 = vunpack.c.l.b16 %v26
  %v75 = vpack.c.b16 %v60, %v59
  %v76 = vpack.c.b16 %v62, %v61
  %v77 = vpack.c.b16 %v64, %v63
  %v78 = vpack.c.b16 %v66, %v65
  %v79 = vpack.c.b16 %v68, %v67
  %v80 = vpack.c.b16 %v70, %v69
  %v81 = vpack.c.b16 %v72, %v71
  %v82 = vpack.c.b16 %v74, %v73
  %v107 = vunpack.c.l.b16 %v27
  %v108 = vunpack.c.l.b16 %v28
  %v109 = vunpack.c.l.b16 %v29
  %v110 = vunpack.c.l.b16 %v30
  %v111 = vunpack.c.l.b16 %v31
  %v112 = vunpack.c.l.b16 %v32
  %v113 = vunpack.c.l.b16 %v33
  %v114 = vunpack.c.l.b16 %v34
  %v115 = vunpack.c.l.b16 %v35
  %v116 = vunpack.c.l.b16 %v36
  %v117 = vunpack.c.l.b16 %v37
  %v118 = vunpack.c.l.b16 %v38
  %v119 = vunpack.c.l.b16 %v39
  %v120 = vunpack.c.l.b16 %v40
  %v121 = vunpack.c.l.b16 %v41
  %v122 = vunpack.c.l.b16 %v42
  %v123 = vpack.c.b16 %v108, %v107
  %v124 = vpack.c.b16 %v110, %v109
  %v125 = vpack.c.b16 %v112, %v111
  %v126 = vpack.c.b16 %v114, %v113
  %v127 = vpack.c.b16 %v116, %v115
  %v128 = vpack.c.b16 %v118, %v117
  %v129 = vpack.c.b16 %v120, %v119
  %v130 = vpack.c.b16 %v122, %v121
  %139 = vmatpush.bf16.msra.mxu0 %v130
  %140 = vmatpush.bf16.msra.mxu0 %v129
  %141 = vmatpush.bf16.msra.mxu0 %v128
  %142 = vmatpush.bf16.msra.mxu0 %v127
  %143 = vmatpush.bf16.msra.mxu0 %v126
  %144 = vmatpush.bf16.msra.mxu0 %v125
  %145 = vmatpush.bf16.msra.mxu0 %v124
  %146 = vmatpush.bf16.msra.mxu0 %v123
  %147 = vmatmul.bf16.gmra.mxu0 %v75
  %v148 = vpop.f32.mrf.mxu0
  %v149 = vadd.f32 0.0, %v148
  %v150 = vpop.f32.mrf.mxu0
  %v151 = vadd.f32 0.0, %v150
  %152 = vmatmul.bf16.gmra.mxu0 %v76
  %v153 = vpop.f32.mrf.mxu0
  %v154 = vadd.f32 0.0, %v153
  %v155 = vpop.f32.mrf.mxu0
  %v156 = vadd.f32 0.0, %v155
  %157 = vmatmul.bf16.gmra.mxu0 %v77
  %v158 = vpop.f32.mrf.mxu0
  %v159 = vadd.f32 0.0, %v158
  %v160 = vpop.f32.mrf.mxu0
  %v161 = vadd.f32 0.0, %v160
  %162 = vmatmul.bf16.gmra.mxu0 %v78
  %v163 = vpop.f32.mrf.mxu0
  %v164 = vadd.f32 0.0, %v163
  %v165 = vpop.f32.mrf.mxu0
  %v166 = vadd.f32 0.0, %v165
  %167 = vmatmul.bf16.gmra.mxu0 %v79
  %v168 = vpop.f32.mrf.mxu0
  %v169 = vadd.f32 0.0, %v168
  %v170 = vpop.f32.mrf.mxu0
  %v171 = vadd.f32 0.0, %v170
  %172 = vmatmul.bf16.gmra.mxu0 %v80
  %v173 = vpop.f32.mrf.mxu0
  %v174 = vadd.f32 0.0, %v173
  %v175 = vpop.f32.mrf.mxu0
  %v176 = vadd.f32 0.0, %v175
  %177 = vmatmul.bf16.gmra.mxu0 %v81
  %v178 = vpop.f32.mrf.mxu0
  %v179 = vadd.f32 0.0, %v178
  %v180 = vpop.f32.mrf.mxu0
  %v181 = vadd.f32 0.0, %v180
  %182 = vmatmul.bf16.gmra.mxu0 %v82
  %v183 = vpop.f32.mrf.mxu0
  %v184 = vadd.f32 0.0, %v183
  %v185 = vpop.f32.mrf.mxu0
  %v186 = vadd.f32 0.0, %v185
  %187 = vdwg.mxu0
  %v188 = vpack.c.bf16 %v149, %v149
  %v189 = vpack.c.bf16 %v151, %v151
  %v190 = vpack.c.bf16 %v154, %v154
  %v191 = vpack.c.bf16 %v156, %v156
  %v192 = vpack.c.bf16 %v159, %v159
  %v193 = vpack.c.bf16 %v161, %v161
  %v194 = vpack.c.bf16 %v164, %v164
  %v195 = vpack.c.bf16 %v166, %v166
  %v196 = vpack.c.bf16 %v169, %v169
  %v197 = vpack.c.bf16 %v171, %v171
  %v198 = vpack.c.bf16 %v174, %v174
  %v199 = vpack.c.bf16 %v176, %v176
  %v200 = vpack.c.bf16 %v179, %v179
  %v201 = vpack.c.bf16 %v181, %v181
  %v202 = vpack.c.bf16 %v184, %v184
  %v203 = vpack.c.bf16 %v186, %v186
  %204 = vst [vmem:[%s2] sm:$0xf] %v188
  %205 = vst [vmem:[%s2 + $0x4] sm:$0xf] %v189
  %206 = vst [vmem:[%s2 + $0x8] sm:$0xf] %v190
  %207 = vst [vmem:[%s2 + $0xc] sm:$0xf] %v191
  %208 = vst [vmem:[%s2 + $0x10] sm:$0xf] %v192
  %209 = vst [vmem:[%s2 + $0x14] sm:$0xf] %v193
  %210 = vst [vmem:[%s2 + $0x18] sm:$0xf] %v194
  %211 = vst [vmem:[%s2 + $0x1c] sm:$0xf] %v195
  %212 = vst [vmem:[%s2 + $0x20] sm:$0xf] %v196
  %213 = vst [vmem:[%s2 + $0x24] sm:$0xf] %v197
  %214 = vst [vmem:[%s2 + $0x28] sm:$0xf] %v198
  %215 = vst [vmem:[%s2 + $0x2c] sm:$0xf] %v199
  %216 = vst [vmem:[%s2 + $0x30] sm:$0xf] %v200
  %217 = vst [vmem:[%s2 + $0x34] sm:$0xf] %v201
  %218 = vst [vmem:[%s2 + $0x38] sm:$0xf] %v202
  %219 = vst [vmem:[%s2 + $0x3c] sm:$0xf] %v203
  // Predicated region
  $region10: #{graph_encoder.7} parent=0 // pred_check
    _
  $region11: #{graph_encoder.7} parent=0 // pred_check_branch
    %221 = sbr.rel (0) target = $region13
  $region12: #{graph_encoder.7} parent=0 // pred_region
    _
  $region13: #{graph_encoder.7} parent=0 // pred_fallthru
    _
  // Predicated region
  $region14: #{graph_encoder.7} parent=0 // pred_check
    _
  $region15: #{graph_encoder.7} parent=0 // pred_check_branch
    %223 = sbr.rel (0) target = $region17
  $region16: #{graph_encoder.7} parent=0 // pred_region
    _
  $region17: #{graph_encoder.7} parent=0 // pred_fallthru
    _

// kernel: graph_encoder.8
$region0: #{graph_encoder.8}
  #allocation0 [shape = 'u32[]', space=smem, size = 0x4, offset = 0x4, fixed_abs, tag = 'smem constant byte address 0x4 - core index']
  #allocation1 [shape = 'u32[72,128]{1,0:T(1,128)}', space=vmem, size = 0x9000, scoped, tag = 'internal scratch']
  #allocation2 [shape = 'f32[128,128]{1,0:T(8,128)}', space=vmem, size = 0x10000, scoped, tag = 'scratch operand']
  %s0 = inlined_call_operand.vmem [shape: bf16[128,128], index: 0, kind: input, shape index: {}]
  %s1 = inlined_call_operand.vmem [shape: bf16[128,128], index: 1, kind: input, shape index: {}]
  %s2 = inlined_call_operand.vmem [shape: f32[1,128], index: 2, kind: input, shape index: {}]
  %s3 = inlined_call_operand.vmem [shape: bf16[128,128], index: 3, kind: output, shape index: {}]
  %s4 = sld [smem:[#allocation0]]
  $region30: #{graph_encoder.8} parent=0
    _
  %s6 = ssub.s32 1, %s4
  %s7 = scalar_select 0, %s6, %s4
  // Predicated region
  $region2: #{graph_encoder.8} parent=0 // pred_check
    _
  $region3: #{graph_encoder.8} parent=0 // pred_check_branch
    %9 = sbr.rel (0) target = $region5
  $region4: #{graph_encoder.8} parent=0 // pred_region
    _
  $region5: #{graph_encoder.8} parent=0 // pred_fallthru
    _
  // Predicated region
  $region6: #{graph_encoder.8} parent=0 // pred_check
    _
  $region7: #{graph_encoder.8} parent=0 // pred_check_branch
    %11 = sbr.rel (0) target = $region9
  $region8: #{graph_encoder.8} parent=0 // pred_region
    _
  $region9: #{graph_encoder.8} parent=0 // pred_fallthru
    _
  // Predicated region
  $region10: #{graph_encoder.8} parent=0 // pred_check
    _
  $region11: #{graph_encoder.8} parent=0 // pred_check_branch
    %13 = sbr.rel (0) target = $region13
  $region12: #{graph_encoder.8} parent=0 // pred_region
    _
  $region13: #{graph_encoder.8} parent=0 // pred_fallthru
    _
  %p14 = scmp.eq.s32.totalorder 0, 0
  // Predicated region
  $region14: #{graph_encoder.8} parent=0 // pred_check
    %p15 = pneg %p14
  $region15: #{graph_encoder.8} parent=0 // pred_check_branch
    %17 = sbr.rel (%p15) target = $region17
  $region16: #{graph_encoder.8} parent=0 // pred_region
    %18 = vst [vmem:[#allocation2] sm:$0xff] 0.0
    %19 = vst [vmem:[#allocation2 + $0x8] sm:$0xff] 0.0
    %20 = vst [vmem:[#allocation2 + $0x10] sm:$0xff] 0.0
    %21 = vst [vmem:[#allocation2 + $0x18] sm:$0xff] 0.0
    %22 = vst [vmem:[#allocation2 + $0x20] sm:$0xff] 0.0
    %23 = vst [vmem:[#allocation2 + $0x28] sm:$0xff] 0.0
    %24 = vst [vmem:[#allocation2 + $0x30] sm:$0xff] 0.0
    %25 = vst [vmem:[#allocation2 + $0x38] sm:$0xff] 0.0
    %26 = vst [vmem:[#allocation2 + $0x40] sm:$0xff] 0.0
    %27 = vst [vmem:[#allocation2 + $0x48] sm:$0xff] 0.0
    %28 = vst [vmem:[#allocation2 + $0x50] sm:$0xff] 0.0
    %29 = vst [vmem:[#allocation2 + $0x58] sm:$0xff] 0.0
    %30 = vst [vmem:[#allocation2 + $0x60] sm:$0xff] 0.0
    %31 = vst [vmem:[#allocation2 + $0x68] sm:$0xff] 0.0
    %32 = vst [vmem:[#allocation2 + $0x70] sm:$0xff] 0.0
    %33 = vst [vmem:[#allocation2 + $0x78] sm:$0xff] 0.0
  $region17: #{graph_encoder.8} parent=0 // pred_fallthru
    _
  %v34 = vld [vmem:[#allocation2] sm:$0xff]
  %v35 = vld [vmem:[#allocation2 + $0x8] sm:$0xff]
  %v36 = vld [vmem:[#allocation2 + $0x10] sm:$0xff]
  %v37 = vld [vmem:[#allocation2 + $0x18] sm:$0xff]
  %v38 = vld [vmem:[#allocation2 + $0x20] sm:$0xff]
  %v39 = vld [vmem:[#allocation2 + $0x28] sm:$0xff]
  %v40 = vld [vmem:[#allocation2 + $0x30] sm:$0xff]
  %v41 = vld [vmem:[#allocation2 + $0x38] sm:$0xff]
  %v42 = vld [vmem:[#allocation2 + $0x40] sm:$0xff]
  %v43 = vld [vmem:[#allocation2 + $0x48] sm:$0xff]
  %v44 = vld [vmem:[#allocation2 + $0x50] sm:$0xff]
  %v45 = vld [vmem:[#allocation2 + $0x58] sm:$0xff]
  %v46 = vld [vmem:[#allocation2 + $0x60] sm:$0xff]
  %v47 = vld [vmem:[#allocation2 + $0x68] sm:$0xff]
  %v48 = vld [vmem:[#allocation2 + $0x70] sm:$0xff]
  %v49 = vld [vmem:[#allocation2 + $0x78] sm:$0xff]
  %v50 = vld [vmem:[%s0] sm:$0xf]
  %v51 = vld [vmem:[%s0 + $0x4] sm:$0xf]
  %v52 = vld [vmem:[%s0 + $0x8] sm:$0xf]
  %v53 = vld [vmem:[%s0 + $0xc] sm:$0xf]
  %v54 = vld [vmem:[%s0 + $0x10] sm:$0xf]
  %v55 = vld [vmem:[%s0 + $0x14] sm:$0xf]
  %v56 = vld [vmem:[%s0 + $0x18] sm:$0xf]
  %v57 = vld [vmem:[%s0 + $0x1c] sm:$0xf]
  %v58 = vld [vmem:[%s0 + $0x20] sm:$0xf]
  %v59 = vld [vmem:[%s0 + $0x24] sm:$0xf]
  %v60 = vld [vmem:[%s0 + $0x28] sm:$0xf]
  %v61 = vld [vmem:[%s0 + $0x2c] sm:$0xf]
  %v62 = vld [vmem:[%s0 + $0x30] sm:$0xf]
  %v63 = vld [vmem:[%s0 + $0x34] sm:$0xf]
  %v64 = vld [vmem:[%s0 + $0x38] sm:$0xf]
  %v65 = vld [vmem:[%s0 + $0x3c] sm:$0xf]
  %v66 = vld [vmem:[%s1] sm:$0xf]
  %v67 = vld [vmem:[%s1 + $0x4] sm:$0xf]
  %v68 = vld [vmem:[%s1 + $0x8] sm:$0xf]
  %v69 = vld [vmem:[%s1 + $0xc] sm:$0xf]
  %v70 = vld [vmem:[%s1 + $0x10] sm:$0xf]
  %v71 = vld [vmem:[%s1 + $0x14] sm:$0xf]
  %v72 = vld [vmem:[%s1 + $0x18] sm:$0xf]
  %v73 = vld [vmem:[%s1 + $0x1c] sm:$0xf]
  %v74 = vld [vmem:[%s1 + $0x20] sm:$0xf]
  %v75 = vld [vmem:[%s1 + $0x24] sm:$0xf]
  %v76 = vld [vmem:[%s1 + $0x28] sm:$0xf]
  %v77 = vld [vmem:[%s1 + $0x2c] sm:$0xf]
  %v78 = vld [vmem:[%s1 + $0x30] sm:$0xf]
  %v79 = vld [vmem:[%s1 + $0x34] sm:$0xf]
  %v80 = vld [vmem:[%s1 + $0x38] sm:$0xf]
  %v81 = vld [vmem:[%s1 + $0x3c] sm:$0xf]
  %v98 = vunpack.c.l.b16 %v50
  %v99 = vunpack.c.l.b16 %v51
  %v100 = vunpack.c.l.b16 %v52
  %v101 = vunpack.c.l.b16 %v53
  %v102 = vunpack.c.l.b16 %v54
  %v103 = vunpack.c.l.b16 %v55
  %v104 = vunpack.c.l.b16 %v56
  %v105 = vunpack.c.l.b16 %v57
  %v106 = vunpack.c.l.b16 %v58
  %v107 = vunpack.c.l.b16 %v59
  %v108 = vunpack.c.l.b16 %v60
  %v109 = vunpack.c.l.b16 %v61
  %v110 = vunpack.c.l.b16 %v62
  %v111 = vunpack.c.l.b16 %v63
  %v112 = vunpack.c.l.b16 %v64
  %v113 = vunpack.c.l.b16 %v65
  %v114 = vpack.c.b16 %v99, %v98
  %v115 = vpack.c.b16 %v101, %v100
  %v116 = vpack.c.b16 %v103, %v102
  %v117 = vpack.c.b16 %v105, %v104
  %v118 = vpack.c.b16 %v107, %v106
  %v119 = vpack.c.b16 %v109, %v108
  %v120 = vpack.c.b16 %v111, %v110
  %v121 = vpack.c.b16 %v113, %v112
  %v146 = vunpack.c.l.b16 %v66
  %v147 = vunpack.c.l.b16 %v67
  %v148 = vunpack.c.l.b16 %v68
  %v149 = vunpack.c.l.b16 %v69
  %v150 = vunpack.c.l.b16 %v70
  %v151 = vunpack.c.l.b16 %v71
  %v152 = vunpack.c.l.b16 %v72
  %v153 = vunpack.c.l.b16 %v73
  %v154 = vunpack.c.l.b16 %v74
  %v155 = vunpack.c.l.b16 %v75
  %v156 = vunpack.c.l.b16 %v76
  %v157 = vunpack.c.l.b16 %v77
  %v158 = vunpack.c.l.b16 %v78
  %v159 = vunpack.c.l.b16 %v79
  %v160 = vunpack.c.l.b16 %v80
  %v161 = vunpack.c.l.b16 %v81
  %v162 = vpack.c.b16 %v147, %v146
  %v163 = vpack.c.b16 %v149, %v148
  %v164 = vpack.c.b16 %v151, %v150
  %v165 = vpack.c.b16 %v153, %v152
  %v166 = vpack.c.b16 %v155, %v154
  %v167 = vpack.c.b16 %v157, %v156
  %v168 = vpack.c.b16 %v159, %v158
  %v169 = vpack.c.b16 %v161, %v160
  %178 = vmatpush.bf16.msra.mxu0 %v169
  %179 = vmatpush.bf16.msra.mxu0 %v168
  %180 = vmatpush.bf16.msra.mxu0 %v167
  %181 = vmatpush.bf16.msra.mxu0 %v166
  %182 = vmatpush.bf16.msra.mxu0 %v165
  %183 = vmatpush.bf16.msra.mxu0 %v164
  %184 = vmatpush.bf16.msra.mxu0 %v163
  %185 = vmatpush.bf16.msra.mxu0 %v162
  %186 = vmatmul.bf16.gmra.mxu0 %v114
  %v187 = vpop.f32.mrf.mxu0
  %v188 = vadd.f32 0.0, %v187
  %v189 = vpop.f32.mrf.mxu0
  %v190 = vadd.f32 0.0, %v189
  %191 = vmatmul.bf16.gmra.mxu0 %v115
  %v192 = vpop.f32.mrf.mxu0
  %v193 = vadd.f32 0.0, %v192
  %v194 = vpop.f32.mrf.mxu0
  %v195 = vadd.f32 0.0, %v194
  %196 = vmatmul.bf16.gmra.mxu0 %v116
  %v197 = vpop.f32.mrf.mxu0
  %v198 = vadd.f32 0.0, %v197
  %v199 = vpop.f32.mrf.mxu0
  %v200 = vadd.f32 0.0, %v199
  %201 = vmatmul.bf16.gmra.mxu0 %v117
  %v202 = vpop.f32.mrf.mxu0
  %v203 = vadd.f32 0.0, %v202
  %v204 = vpop.f32.mrf.mxu0
  %v205 = vadd.f32 0.0, %v204
  %206 = vmatmul.bf16.gmra.mxu0 %v118
  %v207 = vpop.f32.mrf.mxu0
  %v208 = vadd.f32 0.0, %v207
  %v209 = vpop.f32.mrf.mxu0
  %v210 = vadd.f32 0.0, %v209
  %211 = vmatmul.bf16.gmra.mxu0 %v119
  %v212 = vpop.f32.mrf.mxu0
  %v213 = vadd.f32 0.0, %v212
  %v214 = vpop.f32.mrf.mxu0
  %v215 = vadd.f32 0.0, %v214
  %216 = vmatmul.bf16.gmra.mxu0 %v120
  %v217 = vpop.f32.mrf.mxu0
  %v218 = vadd.f32 0.0, %v217
  %v219 = vpop.f32.mrf.mxu0
  %v220 = vadd.f32 0.0, %v219
  %221 = vmatmul.bf16.gmra.mxu0 %v121
  %v222 = vpop.f32.mrf.mxu0
  %v223 = vadd.f32 0.0, %v222
  %v224 = vpop.f32.mrf.mxu0
  %v225 = vadd.f32 0.0, %v224
  %226 = vdwg.mxu0
  %v227 = vadd.f32 %v34, %v188
  %v228 = vadd.f32 %v35, %v190
  %v229 = vadd.f32 %v36, %v193
  %v230 = vadd.f32 %v37, %v195
  %v231 = vadd.f32 %v38, %v198
  %v232 = vadd.f32 %v39, %v200
  %v233 = vadd.f32 %v40, %v203
  %v234 = vadd.f32 %v41, %v205
  %v235 = vadd.f32 %v42, %v208
  %v236 = vadd.f32 %v43, %v210
  %v237 = vadd.f32 %v44, %v213
  %v238 = vadd.f32 %v45, %v215
  %v239 = vadd.f32 %v46, %v218
  %v240 = vadd.f32 %v47, %v220
  %v241 = vadd.f32 %v48, %v223
  %v242 = vadd.f32 %v49, %v225
  %243 = vst [vmem:[#allocation2] sm:$0xff] %v227
  %244 = vst [vmem:[#allocation2 + $0x8] sm:$0xff] %v228
  %245 = vst [vmem:[#allocation2 + $0x10] sm:$0xff] %v229
  %246 = vst [vmem:[#allocation2 + $0x18] sm:$0xff] %v230
  %247 = vst [vmem:[#allocation2 + $0x20] sm:$0xff] %v231
  %248 = vst [vmem:[#allocation2 + $0x28] sm:$0xff] %v232
  %249 = vst [vmem:[#allocation2 + $0x30] sm:$0xff] %v233
  %250 = vst [vmem:[#allocation2 + $0x38] sm:$0xff] %v234
  %251 = vst [vmem:[#allocation2 + $0x40] sm:$0xff] %v235
  %252 = vst [vmem:[#allocation2 + $0x48] sm:$0xff] %v236
  %253 = vst [vmem:[#allocation2 + $0x50] sm:$0xff] %v237
  %254 = vst [vmem:[#allocation2 + $0x58] sm:$0xff] %v238
  %255 = vst [vmem:[#allocation2 + $0x60] sm:$0xff] %v239
  %256 = vst [vmem:[#allocation2 + $0x68] sm:$0xff] %v240
  %257 = vst [vmem:[#allocation2 + $0x70] sm:$0xff] %v241
  %258 = vst [vmem:[#allocation2 + $0x78] sm:$0xff] %v242
  // Predicated region
  $region18: #{graph_encoder.8} parent=0 // pred_check
    %p259 = pneg %p14
  $region19: #{graph_encoder.8} parent=0 // pred_check_branch
    %261 = sbr.rel (%p259) target = $region21
  $region20: #{graph_encoder.8} parent=0 // pred_region
    %v262 = vld [vmem:[#allocation2] sm:$0xff]
    %v263 = vld [vmem:[#allocation2 + $0x8] sm:$0xff]
    %v264 = vld [vmem:[#allocation2 + $0x10] sm:$0xff]
    %v265 = vld [vmem:[#allocation2 + $0x18] sm:$0xff]
    %v266 = vld [vmem:[#allocation2 + $0x20] sm:$0xff]
    %v267 = vld [vmem:[#allocation2 + $0x28] sm:$0xff]
    %v268 = vld [vmem:[#allocation2 + $0x30] sm:$0xff]
    %v269 = vld [vmem:[#allocation2 + $0x38] sm:$0xff]
    %v270 = vld [vmem:[#allocation2 + $0x40] sm:$0xff]
    %v271 = vld [vmem:[#allocation2 + $0x48] sm:$0xff]
    %v272 = vld [vmem:[#allocation2 + $0x50] sm:$0xff]
    %v273 = vld [vmem:[#allocation2 + $0x58] sm:$0xff]
    %v274 = vld [vmem:[#allocation2 + $0x60] sm:$0xff]
    %v275 = vld [vmem:[#allocation2 + $0x68] sm:$0xff]
    %v276 = vld [vmem:[#allocation2 + $0x70] sm:$0xff]
    %v277 = vld [vmem:[#allocation2 + $0x78] sm:$0xff]
    %v278 = vld [vmem:[%s2] sm:$0x1]
    %v280 = vperm.slane %v278, 0
    %v282 = vadd.f32 %v262, %v280
    %v283 = vadd.f32 %v263, %v280
    %v284 = vadd.f32 %v264, %v280
    %v285 = vadd.f32 %v265, %v280
    %v286 = vadd.f32 %v266, %v280
    %v287 = vadd.f32 %v267, %v280
    %v288 = vadd.f32 %v268, %v280
    %v289 = vadd.f32 %v269, %v280
    %v290 = vadd.f32 %v270, %v280
    %v291 = vadd.f32 %v271, %v280
    %v292 = vadd.f32 %v272, %v280
    %v293 = vadd.f32 %v273, %v280
    %v294 = vadd.f32 %v274, %v280
    %v295 = vadd.f32 %v275, %v280
    %v296 = vadd.f32 %v276, %v280
    %v297 = vadd.f32 %v277, %v280
    %v298 = vmax.f32 %v282, 0.0
    %v299 = vmax.f32 %v283, 0.0
    %v300 = vmax.f32 %v284, 0.0
    %v301 = vmax.f32 %v285, 0.0
    %v302 = vmax.f32 %v286, 0.0
    %v303 = vmax.f32 %v287, 0.0
    %v304 = vmax.f32 %v288, 0.0
    %v305 = vmax.f32 %v289, 0.0
    %v306 = vmax.f32 %v290, 0.0
    %v307 = vmax.f32 %v291, 0.0
    %v308 = vmax.f32 %v292, 0.0
    %v309 = vmax.f32 %v293, 0.0
    %v310 = vmax.f32 %v294, 0.0
    %v311 = vmax.f32 %v295, 0.0
    %v312 = vmax.f32 %v296, 0.0
    %v313 = vmax.f32 %v297, 0.0
    %v314 = vpack.c.bf16 %v298, %v298
    %v315 = vpack.c.bf16 %v299, %v299
    %v316 = vpack.c.bf16 %v300, %v300
    %v317 = vpack.c.bf16 %v301, %v301
    %v318 = vpack.c.bf16 %v302, %v302
    %v319 = vpack.c.bf16 %v303, %v303
    %v320 = vpack.c.bf16 %v304, %v304
    %v321 = vpack.c.bf16 %v305, %v305
    %v322 = vpack.c.bf16 %v306, %v306
    %v323 = vpack.c.bf16 %v307, %v307
    %v324 = vpack.c.bf16 %v308, %v308
    %v325 = vpack.c.bf16 %v309, %v309
    %v326 = vpack.c.bf16 %v310, %v310
    %v327 = vpack.c.bf16 %v311, %v311
    %v328 = vpack.c.bf16 %v312, %v312
    %v329 = vpack.c.bf16 %v313, %v313
    %330 = vst [vmem:[%s3] sm:$0xf] %v314
    %331 = vst [vmem:[%s3 + $0x4] sm:$0xf] %v315
    %332 = vst [vmem:[%s3 + $0x8] sm:$0xf] %v316
    %333 = vst [vmem:[%s3 + $0xc] sm:$0xf] %v317
    %334 = vst [vmem:[%s3 + $0x10] sm:$0xf] %v318
    %335 = vst [vmem:[%s3 + $0x14] sm:$0xf] %v319
    %336 = vst [vmem:[%s3 + $0x18] sm:$0xf] %v320
    %337 = vst [vmem:[%s3 + $0x1c] sm:$0xf] %v321
    %338 = vst [vmem:[%s3 + $0x20] sm:$0xf] %v322
    %339 = vst [vmem:[%s3 + $0x24] sm:$0xf] %v323
    %340 = vst [vmem:[%s3 + $0x28] sm:$0xf] %v324
    %341 = vst [vmem:[%s3 + $0x2c] sm:$0xf] %v325
    %342 = vst [vmem:[%s3 + $0x30] sm:$0xf] %v326
    %343 = vst [vmem:[%s3 + $0x34] sm:$0xf] %v327
    %344 = vst [vmem:[%s3 + $0x38] sm:$0xf] %v328
    %345 = vst [vmem:[%s3 + $0x3c] sm:$0xf] %v329
  $region21: #{graph_encoder.8} parent=0 // pred_fallthru
    _
  // Predicated region
  $region22: #{graph_encoder.8} parent=0 // pred_check
    _
  $region23: #{graph_encoder.8} parent=0 // pred_check_branch
    %347 = sbr.rel (0) target = $region25
  $region24: #{graph_encoder.8} parent=0 // pred_region
    _
  $region25: #{graph_encoder.8} parent=0 // pred_fallthru
    _
  // Predicated region
  $region26: #{graph_encoder.8} parent=0 // pred_check
    _
  $region27: #{graph_encoder.8} parent=0 // pred_check_branch
    %349 = sbr.rel (0) target = $region29
  $region28: #{graph_encoder.8} parent=0 // pred_region
    _
  $region29: #{graph_encoder.8} parent=0 // pred_fallthru
    _

// kernel: graph_encoder.12
$region0: #{graph_encoder.12}
  #allocation0 [shape = 'u32[]', space=smem, size = 0x4, offset = 0x4, fixed_abs, tag = 'smem constant byte address 0x4 - core index']
  #allocation1 [shape = 'u32[72,128]{1,0:T(1,128)}', space=vmem, size = 0x9000, scoped, tag = 'internal scratch']
  #allocation2 [shape = 'f32[128,128]{1,0:T(8,128)}', space=vmem, size = 0x10000, scoped, tag = 'scratch operand']
  %s0 = inlined_call_operand.vmem [shape: bf16[128,128], index: 0, kind: input, shape index: {}]
  %s1 = inlined_call_operand.vmem [shape: bf16[128,128], index: 1, kind: input, shape index: {}]
  %s2 = inlined_call_operand.vmem [shape: f32[1,128], index: 2, kind: input, shape index: {}]
  %s3 = inlined_call_operand.vmem [shape: bf16[128,128], index: 3, kind: output, shape index: {}]
  %s4 = sld [smem:[#allocation0]]
  $region30: #{graph_encoder.12} parent=0
    _
  %s6 = ssub.s32 1, %s4
  %s7 = scalar_select 0, %s6, %s4
  // Predicated region
  $region2: #{graph_encoder.12} parent=0 // pred_check
    _
  $region3: #{graph_encoder.12} parent=0 // pred_check_branch
    %9 = sbr.rel (0) target = $region5
  $region4: #{graph_encoder.12} parent=0 // pred_region
    _
  $region5: #{graph_encoder.12} parent=0 // pred_fallthru
    _
  // Predicated region
  $region6: #{graph_encoder.12} parent=0 // pred_check
    _
  $region7: #{graph_encoder.12} parent=0 // pred_check_branch
    %11 = sbr.rel (0) target = $region9
  $region8: #{graph_encoder.12} parent=0 // pred_region
    _
  $region9: #{graph_encoder.12} parent=0 // pred_fallthru
    _
  // Predicated region
  $region10: #{graph_encoder.12} parent=0 // pred_check
    _
  $region11: #{graph_encoder.12} parent=0 // pred_check_branch
    %13 = sbr.rel (0) target = $region13
  $region12: #{graph_encoder.12} parent=0 // pred_region
    _
  $region13: #{graph_encoder.12} parent=0 // pred_fallthru
    _
  %p14 = scmp.eq.s32.totalorder 0, 0
  // Predicated region
  $region14: #{graph_encoder.12} parent=0 // pred_check
    %p15 = pneg %p14
  $region15: #{graph_encoder.12} parent=0 // pred_check_branch
    %17 = sbr.rel (%p15) target = $region17
  $region16: #{graph_encoder.12} parent=0 // pred_region
    %18 = vst [vmem:[#allocation2] sm:$0xff] 0.0
    %19 = vst [vmem:[#allocation2 + $0x8] sm:$0xff] 0.0
    %20 = vst [vmem:[#allocation2 + $0x10] sm:$0xff] 0.0
    %21 = vst [vmem:[#allocation2 + $0x18] sm:$0xff] 0.0
    %22 = vst [vmem:[#allocation2 + $0x20] sm:$0xff] 0.0
    %23 = vst [vmem:[#allocation2 + $0x28] sm:$0xff] 0.0
    %24 = vst [vmem:[#allocation2 + $0x30] sm:$0xff] 0.0
    %25 = vst [vmem:[#allocation2 + $0x38] sm:$0xff] 0.0
    %26 = vst [vmem:[#allocation2 + $0x40] sm:$0xff] 0.0
    %27 = vst [vmem:[#allocation2 + $0x48] sm:$0xff] 0.0
    %28 = vst [vmem:[#allocation2 + $0x50] sm:$0xff] 0.0
    %29 = vst [vmem:[#allocation2 + $0x58] sm:$0xff] 0.0
    %30 = vst [vmem:[#allocation2 + $0x60] sm:$0xff] 0.0
    %31 = vst [vmem:[#allocation2 + $0x68] sm:$0xff] 0.0
    %32 = vst [vmem:[#allocation2 + $0x70] sm:$0xff] 0.0
    %33 = vst [vmem:[#allocation2 + $0x78] sm:$0xff] 0.0
  $region17: #{graph_encoder.12} parent=0 // pred_fallthru
    _
  %v34 = vld [vmem:[#allocation2] sm:$0xff]
  %v35 = vld [vmem:[#allocation2 + $0x8] sm:$0xff]
  %v36 = vld [vmem:[#allocation2 + $0x10] sm:$0xff]
  %v37 = vld [vmem:[#allocation2 + $0x18] sm:$0xff]
  %v38 = vld [vmem:[#allocation2 + $0x20] sm:$0xff]
  %v39 = vld [vmem:[#allocation2 + $0x28] sm:$0xff]
  %v40 = vld [vmem:[#allocation2 + $0x30] sm:$0xff]
  %v41 = vld [vmem:[#allocation2 + $0x38] sm:$0xff]
  %v42 = vld [vmem:[#allocation2 + $0x40] sm:$0xff]
  %v43 = vld [vmem:[#allocation2 + $0x48] sm:$0xff]
  %v44 = vld [vmem:[#allocation2 + $0x50] sm:$0xff]
  %v45 = vld [vmem:[#allocation2 + $0x58] sm:$0xff]
  %v46 = vld [vmem:[#allocation2 + $0x60] sm:$0xff]
  %v47 = vld [vmem:[#allocation2 + $0x68] sm:$0xff]
  %v48 = vld [vmem:[#allocation2 + $0x70] sm:$0xff]
  %v49 = vld [vmem:[#allocation2 + $0x78] sm:$0xff]
  %v50 = vld [vmem:[%s0] sm:$0xf]
  %v51 = vld [vmem:[%s0 + $0x4] sm:$0xf]
  %v52 = vld [vmem:[%s0 + $0x8] sm:$0xf]
  %v53 = vld [vmem:[%s0 + $0xc] sm:$0xf]
  %v54 = vld [vmem:[%s0 + $0x10] sm:$0xf]
  %v55 = vld [vmem:[%s0 + $0x14] sm:$0xf]
  %v56 = vld [vmem:[%s0 + $0x18] sm:$0xf]
  %v57 = vld [vmem:[%s0 + $0x1c] sm:$0xf]
  %v58 = vld [vmem:[%s0 + $0x20] sm:$0xf]
  %v59 = vld [vmem:[%s0 + $0x24] sm:$0xf]
  %v60 = vld [vmem:[%s0 + $0x28] sm:$0xf]
  %v61 = vld [vmem:[%s0 + $0x2c] sm:$0xf]
  %v62 = vld [vmem:[%s0 + $0x30] sm:$0xf]
  %v63 = vld [vmem:[%s0 + $0x34] sm:$0xf]
  %v64 = vld [vmem:[%s0 + $0x38] sm:$0xf]
  %v65 = vld [vmem:[%s0 + $0x3c] sm:$0xf]
  %v66 = vld [vmem:[%s1] sm:$0xf]
  %v67 = vld [vmem:[%s1 + $0x4] sm:$0xf]
  %v68 = vld [vmem:[%s1 + $0x8] sm:$0xf]
  %v69 = vld [vmem:[%s1 + $0xc] sm:$0xf]
  %v70 = vld [vmem:[%s1 + $0x10] sm:$0xf]
  %v71 = vld [vmem:[%s1 + $0x14] sm:$0xf]
  %v72 = vld [vmem:[%s1 + $0x18] sm:$0xf]
  %v73 = vld [vmem:[%s1 + $0x1c] sm:$0xf]
  %v74 = vld [vmem:[%s1 + $0x20] sm:$0xf]
  %v75 = vld [vmem:[%s1 + $0x24] sm:$0xf]
  %v76 = vld [vmem:[%s1 + $0x28] sm:$0xf]
  %v77 = vld [vmem:[%s1 + $0x2c] sm:$0xf]
  %v78 = vld [vmem:[%s1 + $0x30] sm:$0xf]
  %v79 = vld [vmem:[%s1 + $0x34] sm:$0xf]
  %v80 = vld [vmem:[%s1 + $0x38] sm:$0xf]
  %v81 = vld [vmem:[%s1 + $0x3c] sm:$0xf]
  %v98 = vunpack.c.l.b16 %v50
  %v99 = vunpack.c.l.b16 %v51
  %v100 = vunpack.c.l.b16 %v52
  %v101 = vunpack.c.l.b16 %v53
  %v102 = vunpack.c.l.b16 %v54
  %v103 = vunpack.c.l.b16 %v55
  %v104 = vunpack.c.l.b16 %v56
  %v105 = vunpack.c.l.b16 %v57
  %v106 = vunpack.c.l.b16 %v58
  %v107 = vunpack.c.l.b16 %v59
  %v108 = vunpack.c.l.b16 %v60
  %v109 = vunpack.c.l.b16 %v61
  %v110 = vunpack.c.l.b16 %v62
  %v111 = vunpack.c.l.b16 %v63
  %v112 = vunpack.c.l.b16 %v64
  %v113 = vunpack.c.l.b16 %v65
  %v114 = vpack.c.b16 %v99, %v98
  %v115 = vpack.c.b16 %v101, %v100
  %v116 = vpack.c.b16 %v103, %v102
  %v117 = vpack.c.b16 %v105, %v104
  %v118 = vpack.c.b16 %v107, %v106
  %v119 = vpack.c.b16 %v109, %v108
  %v120 = vpack.c.b16 %v111, %v110
  %v121 = vpack.c.b16 %v113, %v112
  %v146 = vunpack.c.l.b16 %v66
  %v147 = vunpack.c.l.b16 %v67
  %v148 = vunpack.c.l.b16 %v68
  %v149 = vunpack.c.l.b16 %v69
  %v150 = vunpack.c.l.b16 %v70
  %v151 = vunpack.c.l.b16 %v71
  %v152 = vunpack.c.l.b16 %v72
  %v153 = vunpack.c.l.b16 %v73
  %v154 = vunpack.c.l.b16 %v74
  %v155 = vunpack.c.l.b16 %v75
  %v156 = vunpack.c.l.b16 %v76
  %v157 = vunpack.c.l.b16 %v77
  %v158 = vunpack.c.l.b16 %v78
  %v159 = vunpack.c.l.b16 %v79
  %v160 = vunpack.c.l.b16 %v80
  %v161 = vunpack.c.l.b16 %v81
  %v162 = vpack.c.b16 %v147, %v146
  %v163 = vpack.c.b16 %v149, %v148
  %v164 = vpack.c.b16 %v151, %v150
  %v165 = vpack.c.b16 %v153, %v152
  %v166 = vpack.c.b16 %v155, %v154
  %v167 = vpack.c.b16 %v157, %v156
  %v168 = vpack.c.b16 %v159, %v158
  %v169 = vpack.c.b16 %v161, %v160
  %178 = vmatpush.bf16.msra.mxu0 %v169
  %179 = vmatpush.bf16.msra.mxu0 %v168
  %180 = vmatpush.bf16.msra.mxu0 %v167
  %181 = vmatpush.bf16.msra.mxu0 %v166
  %182 = vmatpush.bf16.msra.mxu0 %v165
  %183 = vmatpush.bf16.msra.mxu0 %v164
  %184 = vmatpush.bf16.msra.mxu0 %v163
  %185 = vmatpush.bf16.msra.mxu0 %v162
  %186 = vmatmul.bf16.gmra.mxu0 %v114
  %v187 = vpop.f32.mrf.mxu0
  %v188 = vadd.f32 0.0, %v187
  %v189 = vpop.f32.mrf.mxu0
  %v190 = vadd.f32 0.0, %v189
  %191 = vmatmul.bf16.gmra.mxu0 %v115
  %v192 = vpop.f32.mrf.mxu0
  %v193 = vadd.f32 0.0, %v192
  %v194 = vpop.f32.mrf.mxu0
  %v195 = vadd.f32 0.0, %v194
  %196 = vmatmul.bf16.gmra.mxu0 %v116
  %v197 = vpop.f32.mrf.mxu0
  %v198 = vadd.f32 0.0, %v197
  %v199 = vpop.f32.mrf.mxu0
  %v200 = vadd.f32 0.0, %v199
  %201 = vmatmul.bf16.gmra.mxu0 %v117
  %v202 = vpop.f32.mrf.mxu0
  %v203 = vadd.f32 0.0, %v202
  %v204 = vpop.f32.mrf.mxu0
  %v205 = vadd.f32 0.0, %v204
  %206 = vmatmul.bf16.gmra.mxu0 %v118
  %v207 = vpop.f32.mrf.mxu0
  %v208 = vadd.f32 0.0, %v207
  %v209 = vpop.f32.mrf.mxu0
  %v210 = vadd.f32 0.0, %v209
  %211 = vmatmul.bf16.gmra.mxu0 %v119
  %v212 = vpop.f32.mrf.mxu0
  %v213 = vadd.f32 0.0, %v212
  %v214 = vpop.f32.mrf.mxu0
  %v215 = vadd.f32 0.0, %v214
  %216 = vmatmul.bf16.gmra.mxu0 %v120
  %v217 = vpop.f32.mrf.mxu0
  %v218 = vadd.f32 0.0, %v217
  %v219 = vpop.f32.mrf.mxu0
  %v220 = vadd.f32 0.0, %v219
  %221 = vmatmul.bf16.gmra.mxu0 %v121
  %v222 = vpop.f32.mrf.mxu0
  %v223 = vadd.f32 0.0, %v222
  %v224 = vpop.f32.mrf.mxu0
  %v225 = vadd.f32 0.0, %v224
  %226 = vdwg.mxu0
  %v227 = vadd.f32 %v34, %v188
  %v228 = vadd.f32 %v35, %v190
  %v229 = vadd.f32 %v36, %v193
  %v230 = vadd.f32 %v37, %v195
  %v231 = vadd.f32 %v38, %v198
  %v232 = vadd.f32 %v39, %v200
  %v233 = vadd.f32 %v40, %v203
  %v234 = vadd.f32 %v41, %v205
  %v235 = vadd.f32 %v42, %v208
  %v236 = vadd.f32 %v43, %v210
  %v237 = vadd.f32 %v44, %v213
  %v238 = vadd.f32 %v45, %v215
  %v239 = vadd.f32 %v46, %v218
  %v240 = vadd.f32 %v47, %v220
  %v241 = vadd.f32 %v48, %v223
  %v242 = vadd.f32 %v49, %v225
  %243 = vst [vmem:[#allocation2] sm:$0xff] %v227
  %244 = vst [vmem:[#allocation2 + $0x8] sm:$0xff] %v228
  %245 = vst [vmem:[#allocation2 + $0x10] sm:$0xff] %v229
  %246 = vst [vmem:[#allocation2 + $0x18] sm:$0xff] %v230
  %247 = vst [vmem:[#allocation2 + $0x20] sm:$0xff] %v231
  %248 = vst [vmem:[#allocation2 + $0x28] sm:$0xff] %v232
  %249 = vst [vmem:[#allocation2 + $0x30] sm:$0xff] %v233
  %250 = vst [vmem:[#allocation2 + $0x38] sm:$0xff] %v234
  %251 = vst [vmem:[#allocation2 + $0x40] sm:$0xff] %v235
  %252 = vst [vmem:[#allocation2 + $0x48] sm:$0xff] %v236
  %253 = vst [vmem:[#allocation2 + $0x50] sm:$0xff] %v237
  %254 = vst [vmem:[#allocation2 + $0x58] sm:$0xff] %v238
  %255 = vst [vmem:[#allocation2 + $0x60] sm:$0xff] %v239
  %256 = vst [vmem:[#allocation2 + $0x68] sm:$0xff] %v240
  %257 = vst [vmem:[#allocation2 + $0x70] sm:$0xff] %v241
  %258 = vst [vmem:[#allocation2 + $0x78] sm:$0xff] %v242
  // Predicated region
  $region18: #{graph_encoder.12} parent=0 // pred_check
    %p259 = pneg %p14
  $region19: #{graph_encoder.12} parent=0 // pred_check_branch
    %261 = sbr.rel (%p259) target = $region21
  $region20: #{graph_encoder.12} parent=0 // pred_region
    %v262 = vld [vmem:[#allocation2] sm:$0xff]
    %v263 = vld [vmem:[#allocation2 + $0x8] sm:$0xff]
    %v264 = vld [vmem:[#allocation2 + $0x10] sm:$0xff]
    %v265 = vld [vmem:[#allocation2 + $0x18] sm:$0xff]
    %v266 = vld [vmem:[#allocation2 + $0x20] sm:$0xff]
    %v267 = vld [vmem:[#allocation2 + $0x28] sm:$0xff]
    %v268 = vld [vmem:[#allocation2 + $0x30] sm:$0xff]
    %v269 = vld [vmem:[#allocation2 + $0x38] sm:$0xff]
    %v270 = vld [vmem:[#allocation2 + $0x40] sm:$0xff]
    %v271 = vld [vmem:[#allocation2 + $0x48] sm:$0xff]
    %v272 = vld [vmem:[#allocation2 + $0x50] sm:$0xff]
    %v273 = vld [vmem:[#allocation2 + $0x58] sm:$0xff]
    %v274 = vld [vmem:[#allocation2 + $0x60] sm:$0xff]
    %v275 = vld [vmem:[#allocation2 + $0x68] sm:$0xff]
    %v276 = vld [vmem:[#allocation2 + $0x70] sm:$0xff]
    %v277 = vld [vmem:[#allocation2 + $0x78] sm:$0xff]
    %v278 = vld [vmem:[%s2] sm:$0x1]
    %v280 = vperm.slane %v278, 0
    %v282 = vadd.f32 %v262, %v280
    %v283 = vadd.f32 %v263, %v280
    %v284 = vadd.f32 %v264, %v280
    %v285 = vadd.f32 %v265, %v280
    %v286 = vadd.f32 %v266, %v280
    %v287 = vadd.f32 %v267, %v280
    %v288 = vadd.f32 %v268, %v280
    %v289 = vadd.f32 %v269, %v280
    %v290 = vadd.f32 %v270, %v280
    %v291 = vadd.f32 %v271, %v280
    %v292 = vadd.f32 %v272, %v280
    %v293 = vadd.f32 %v273, %v280
    %v294 = vadd.f32 %v274, %v280
    %v295 = vadd.f32 %v275, %v280
    %v296 = vadd.f32 %v276, %v280
    %v297 = vadd.f32 %v277, %v280
    %v298 = vpack.c.bf16 %v282, %v282
    %v299 = vpack.c.bf16 %v283, %v283
    %v300 = vpack.c.bf16 %v284, %v284
    %v301 = vpack.c.bf16 %v285, %v285
    %v302 = vpack.c.bf16 %v286, %v286
    %v303 = vpack.c.bf16 %v287, %v287
    %v304 = vpack.c.bf16 %v288, %v288
    %v305 = vpack.c.bf16 %v289, %v289
    %v306 = vpack.c.bf16 %v290, %v290
    %v307 = vpack.c.bf16 %v291, %v291
    %v308 = vpack.c.bf16 %v292, %v292
    %v309 = vpack.c.bf16 %v293, %v293
    %v310 = vpack.c.bf16 %v294, %v294
    %v311 = vpack.c.bf16 %v295, %v295
    %v312 = vpack.c.bf16 %v296, %v296
    %v313 = vpack.c.bf16 %v297, %v297
    %314 = vst [vmem:[%s3] sm:$0xf] %v298
    %315 = vst [vmem:[%s3 + $0x4] sm:$0xf] %v299
    %316 = vst [vmem:[%s3 + $0x8] sm:$0xf] %v300
    %317 = vst [vmem:[%s3 + $0xc] sm:$0xf] %v301
    %318 = vst [vmem:[%s3 + $0x10] sm:$0xf] %v302
    %319 = vst [vmem:[%s3 + $0x14] sm:$0xf] %v303
    %320 = vst [vmem:[%s3 + $0x18] sm:$0xf] %v304
    %321 = vst [vmem:[%s3 + $0x1c] sm:$0xf] %v305
    %322 = vst [vmem:[%s3 + $0x20] sm:$0xf] %v306
    %323 = vst [vmem:[%s3 + $0x24] sm:$0xf] %v307
    %324 = vst [vmem:[%s3 + $0x28] sm:$0xf] %v308
    %325 = vst [vmem:[%s3 + $0x2c] sm:$0xf] %v309
    %326 = vst [vmem:[%s3 + $0x30] sm:$0xf] %v310
    %327 = vst [vmem:[%s3 + $0x34] sm:$0xf] %v311
    %328 = vst [vmem:[%s3 + $0x38] sm:$0xf] %v312
    %329 = vst [vmem:[%s3 + $0x3c] sm:$0xf] %v313
  $region21: #{graph_encoder.12} parent=0 // pred_fallthru
    _
  // Predicated region
  $region22: #{graph_encoder.12} parent=0 // pred_check
    _
  $region23: #{graph_encoder.12} parent=0 // pred_check_branch
    %331 = sbr.rel (0) target = $region25
  $region24: #{graph_encoder.12} parent=0 // pred_region
    _
  $region25: #{graph_encoder.12} parent=0 // pred_fallthru
    _
  // Predicated region
  $region26: #{graph_encoder.12} parent=0 // pred_check
    _
  $region27: #{graph_encoder.12} parent=0 // pred_check_branch
    %333 = sbr.rel (0) target = $region29
  $region28: #{graph_encoder.12} parent=0 // pred_region
    _
  $region29: #{graph_encoder.12} parent=0 // pred_fallthru
    _

// kernel: graph_encoder.13
$region0: #{graph_encoder.13}
  #allocation0 [shape = 'u32[]', space=smem, size = 0x4, offset = 0x4, fixed_abs, tag = 'smem constant byte address 0x4 - core index']
  #allocation1 [shape = 'u32[72,128]{1,0:T(1,128)}', space=vmem, size = 0x9000, scoped, tag = 'internal scratch']
  #allocation2 [shape = 'f32[8,128]{1,0:T(8,128)}', space=vmem, size = 0x1000, scoped, tag = 'scratch operand']
  %s0 = inlined_call_operand.vmem [shape: bf16[8,128], index: 0, kind: input, shape index: {}]
  %s1 = inlined_call_operand.vmem [shape: bf16[128,128], index: 1, kind: input, shape index: {}]
  %s2 = inlined_call_operand.vmem [shape: bf16[128,128], index: 2, kind: input, shape index: {}]
  %s3 = inlined_call_operand.vmem [shape: f32[1,128], index: 3, kind: input, shape index: {}]
  %s4 = inlined_call_operand.vmem [shape: bf16[128,128], index: 4, kind: input, shape index: {}]
  %s5 = inlined_call_operand.vmem [shape: f32[1,128], index: 5, kind: input, shape index: {}]
  %s6 = inlined_call_operand.vmem [shape: f32[8,128], index: 6, kind: output, shape index: {}]
  %s7 = sld [smem:[#allocation0]]
  $region42: #{graph_encoder.13} parent=0
    _
  %s9 = ssub.s32 1, %s7
  %s10 = scalar_select 0, %s9, %s7
  // Predicated region
  $region2: #{graph_encoder.13} parent=0 // pred_check
    _
  $region3: #{graph_encoder.13} parent=0 // pred_check_branch
    %12 = sbr.rel (0) target = $region5
  $region4: #{graph_encoder.13} parent=0 // pred_region
    _
  $region5: #{graph_encoder.13} parent=0 // pred_fallthru
    _
  // Predicated region
  $region6: #{graph_encoder.13} parent=0 // pred_check
    _
  $region7: #{graph_encoder.13} parent=0 // pred_check_branch
    %14 = sbr.rel (0) target = $region9
  $region8: #{graph_encoder.13} parent=0 // pred_region
    _
  $region9: #{graph_encoder.13} parent=0 // pred_fallthru
    _
  // Predicated region
  $region10: #{graph_encoder.13} parent=0 // pred_check
    _
  $region11: #{graph_encoder.13} parent=0 // pred_check_branch
    %16 = sbr.rel (0) target = $region13
  $region12: #{graph_encoder.13} parent=0 // pred_region
    _
  $region13: #{graph_encoder.13} parent=0 // pred_fallthru
    _
  // Predicated region
  $region14: #{graph_encoder.13} parent=0 // pred_check
    _
  $region15: #{graph_encoder.13} parent=0 // pred_check_branch
    %18 = sbr.rel (0) target = $region17
  $region16: #{graph_encoder.13} parent=0 // pred_region
    _
  $region17: #{graph_encoder.13} parent=0 // pred_fallthru
    _
  // Predicated region
  $region18: #{graph_encoder.13} parent=0 // pred_check
    _
  $region19: #{graph_encoder.13} parent=0 // pred_check_branch
    %20 = sbr.rel (0) target = $region21
  $region20: #{graph_encoder.13} parent=0 // pred_region
    _
  $region21: #{graph_encoder.13} parent=0 // pred_fallthru
    _
  // Predicated region
  $region22: #{graph_encoder.13} parent=0 // pred_check
    _
  $region23: #{graph_encoder.13} parent=0 // pred_check_branch
    %22 = sbr.rel (0) target = $region25
  $region24: #{graph_encoder.13} parent=0 // pred_region
    _
  $region25: #{graph_encoder.13} parent=0 // pred_fallthru
    _
  %p23 = scmp.eq.s32.totalorder 0, 0
  // Predicated region
  $region26: #{graph_encoder.13} parent=0 // pred_check
    %p24 = pneg %p23
  $region27: #{graph_encoder.13} parent=0 // pred_check_branch
    %26 = sbr.rel (%p24) target = $region29
  $region28: #{graph_encoder.13} parent=0 // pred_region
    %27 = vst [vmem:[#allocation2] sm:$0xff] 0.0
  $region29: #{graph_encoder.13} parent=0 // pred_fallthru
    _
  %v28 = vld [vmem:[#allocation2] sm:$0xff]
  %v29 = vld [vmem:[%s0] sm:$0xf]
  %v30 = vld [vmem:[%s1] sm:$0xf]
  %v31 = vld [vmem:[%s1 + $0x4] sm:$0xf]
  %v32 = vld [vmem:[%s1 + $0x8] sm:$0xf]
  %v33 = vld [vmem:[%s1 + $0xc] sm:$0xf]
  %v34 = vld [vmem:[%s1 + $0x10] sm:$0xf]
  %v35 = vld [vmem:[%s1 + $0x14] sm:$0xf]
  %v36 = vld [vmem:[%s1 + $0x18] sm:$0xf]
  %v37 = vld [vmem:[%s1 + $0x1c] sm:$0xf]
  %v38 = vld [vmem:[%s1 + $0x20] sm:$0xf]
  %v39 = vld [vmem:[%s1 + $0x24] sm:$0xf]
  %v40 = vld [vmem:[%s1 + $0x28] sm:$0xf]
  %v41 = vld [vmem:[%s1 + $0x2c] sm:$0xf]
  %v42 = vld [vmem:[%s1 + $0x30] sm:$0xf]
  %v43 = vld [vmem:[%s1 + $0x34] sm:$0xf]
  %v44 = vld [vmem:[%s1 + $0x38] sm:$0xf]
  %v45 = vld [vmem:[%s1 + $0x3c] sm:$0xf]
  %v62 = vunpack.c.l.b16 %v30
  %v63 = vunpack.c.l.b16 %v31
  %v64 = vunpack.c.l.b16 %v32
  %v65 = vunpack.c.l.b16 %v33
  %v66 = vunpack.c.l.b16 %v34
  %v67 = vunpack.c.l.b16 %v35
  %v68 = vunpack.c.l.b16 %v36
  %v69 = vunpack.c.l.b16 %v37
  %v70 = vunpack.c.l.b16 %v38
  %v71 = vunpack.c.l.b16 %v39
  %v72 = vunpack.c.l.b16 %v40
  %v73 = vunpack.c.l.b16 %v41
  %v74 = vunpack.c.l.b16 %v42
  %v75 = vunpack.c.l.b16 %v43
  %v76 = vunpack.c.l.b16 %v44
  %v77 = vunpack.c.l.b16 %v45
  %v78 = vpack.c.b16 %v63, %v62
  %v79 = vpack.c.b16 %v65, %v64
  %v80 = vpack.c.b16 %v67, %v66
  %v81 = vpack.c.b16 %v69, %v68
  %v82 = vpack.c.b16 %v71, %v70
  %v83 = vpack.c.b16 %v73, %v72
  %v84 = vpack.c.b16 %v75, %v74
  %v85 = vpack.c.b16 %v77, %v76
  %94 = vmatpush.bf16.msra.mxu0 %v85
  %95 = vmatpush.bf16.msra.mxu0 %v84
  %96 = vmatpush.bf16.msra.mxu0 %v83
  %97 = vmatpush.bf16.msra.mxu0 %v82
  %98 = vmatpush.bf16.msra.mxu0 %v81
  %99 = vmatpush.bf16.msra.mxu0 %v80
  %100 = vmatpush.bf16.msra.mxu0 %v79
  %101 = vmatpush.bf16.msra.mxu0 %v78
  %102 = vmatmul.bf16.gmra.mxu0 %v29
  %v103 = vpop.f32.mrf.mxu0
  %v104 = vadd.f32 0.0, %v103
  %v105 = vpop.f32.mrf.mxu0
  %106 = vdwg.mxu0
  %v107 = vadd.f32 %v28, %v104
  %108 = vst [vmem:[#allocation2] sm:$0xff] %v107
  // Predicated region
  $region30: #{graph_encoder.13} parent=0 // pred_check
    %p109 = pneg %p23
  $region31: #{graph_encoder.13} parent=0 // pred_check_branch
    %111 = sbr.rel (%p109) target = $region33
  $region32: #{graph_encoder.13} parent=0 // pred_region
    %v112 = vld [vmem:[#allocation2] sm:$0xff]
    %v113 = vpack.c.bf16 %v112, %v112
    %v114 = vld [vmem:[%s2] sm:$0xf]
    %v115 = vld [vmem:[%s2 + $0x4] sm:$0xf]
    %v116 = vld [vmem:[%s2 + $0x8] sm:$0xf]
    %v117 = vld [vmem:[%s2 + $0xc] sm:$0xf]
    %v118 = vld [vmem:[%s2 + $0x10] sm:$0xf]
    %v119 = vld [vmem:[%s2 + $0x14] sm:$0xf]
    %v120 = vld [vmem:[%s2 + $0x18] sm:$0xf]
    %v121 = vld [vmem:[%s2 + $0x1c] sm:$0xf]
    %v122 = vld [vmem:[%s2 + $0x20] sm:$0xf]
    %v123 = vld [vmem:[%s2 + $0x24] sm:$0xf]
    %v124 = vld [vmem:[%s2 + $0x28] sm:$0xf]
    %v125 = vld [vmem:[%s2 + $0x2c] sm:$0xf]
    %v126 = vld [vmem:[%s2 + $0x30] sm:$0xf]
    %v127 = vld [vmem:[%s2 + $0x34] sm:$0xf]
    %v128 = vld [vmem:[%s2 + $0x38] sm:$0xf]
    %v129 = vld [vmem:[%s2 + $0x3c] sm:$0xf]
    %v130 = vld [vmem:[%s3] sm:$0x1]
    %v132 = vperm.slane %v130, 0
    %v150 = vunpack.c.l.b16 %v114
    %v151 = vunpack.c.l.b16 %v115
    %v152 = vunpack.c.l.b16 %v116
    %v153 = vunpack.c.l.b16 %v117
    %v154 = vunpack.c.l.b16 %v118
    %v155 = vunpack.c.l.b16 %v119
    %v156 = vunpack.c.l.b16 %v120
    %v157 = vunpack.c.l.b16 %v121
    %v158 = vunpack.c.l.b16 %v122
    %v159 = vunpack.c.l.b16 %v123
    %v160 = vunpack.c.l.b16 %v124
    %v161 = vunpack.c.l.b16 %v125
    %v162 = vunpack.c.l.b16 %v126
    %v163 = vunpack.c.l.b16 %v127
    %v164 = vunpack.c.l.b16 %v128
    %v165 = vunpack.c.l.b16 %v129
    %v166 = vpack.c.b16 %v151, %v150
    %v167 = vpack.c.b16 %v153, %v152
    %v168 = vpack.c.b16 %v155, %v154
    %v169 = vpack.c.b16 %v157, %v156
    %v170 = vpack.c.b16 %v159, %v158
    %v171 = vpack.c.b16 %v161, %v160
    %v172 = vpack.c.b16 %v163, %v162
    %v173 = vpack.c.b16 %v165, %v164
    %182 = vmatpush.bf16.msra.mxu0 %v173
    %183 = vmatpush.bf16.msra.mxu0 %v172
    %184 = vmatpush.bf16.msra.mxu0 %v171
    %185 = vmatpush.bf16.msra.mxu0 %v170
    %186 = vmatpush.bf16.msra.mxu0 %v169
    %187 = vmatpush.bf16.msra.mxu0 %v168
    %188 = vmatpush.bf16.msra.mxu0 %v167
    %189 = vmatpush.bf16.msra.mxu0 %v166
    %190 = vmatmul.bf16.gmra.mxu0 %v113
    %v191 = vpop.f32.mrf.mxu0
    %v192 = vadd.f32 %v132, %v191
    %v193 = vpop.f32.mrf.mxu0
    %194 = vdwg.mxu0
    %v195 = vmax.f32 %v192, 0.0
    %v196 = vpack.c.bf16 %v195, %v195
    %v197 = vld [vmem:[%s4] sm:$0xf]
    %v198 = vld [vmem:[%s4 + $0x4] sm:$0xf]
    %v199 = vld [vmem:[%s4 + $0x8] sm:$0xf]
    %v200 = vld [vmem:[%s4 + $0xc] sm:$0xf]
    %v201 = vld [vmem:[%s4 + $0x10] sm:$0xf]
    %v202 = vld [vmem:[%s4 + $0x14] sm:$0xf]
    %v203 = vld [vmem:[%s4 + $0x18] sm:$0xf]
    %v204 = vld [vmem:[%s4 + $0x1c] sm:$0xf]
    %v205 = vld [vmem:[%s4 + $0x20] sm:$0xf]
    %v206 = vld [vmem:[%s4 + $0x24] sm:$0xf]
    %v207 = vld [vmem:[%s4 + $0x28] sm:$0xf]
    %v208 = vld [vmem:[%s4 + $0x2c] sm:$0xf]
    %v209 = vld [vmem:[%s4 + $0x30] sm:$0xf]
    %v210 = vld [vmem:[%s4 + $0x34] sm:$0xf]
    %v211 = vld [vmem:[%s4 + $0x38] sm:$0xf]
    %v212 = vld [vmem:[%s4 + $0x3c] sm:$0xf]
    %v213 = vld [vmem:[%s5] sm:$0x1]
    %v215 = vperm.slane %v213, 0
    %v233 = vunpack.c.l.b16 %v197
    %v234 = vunpack.c.l.b16 %v198
    %v235 = vunpack.c.l.b16 %v199
    %v236 = vunpack.c.l.b16 %v200
    %v237 = vunpack.c.l.b16 %v201
    %v238 = vunpack.c.l.b16 %v202
    %v239 = vunpack.c.l.b16 %v203
    %v240 = vunpack.c.l.b16 %v204
    %v241 = vunpack.c.l.b16 %v205
    %v242 = vunpack.c.l.b16 %v206
    %v243 = vunpack.c.l.b16 %v207
    %v244 = vunpack.c.l.b16 %v208
    %v245 = vunpack.c.l.b16 %v209
    %v246 = vunpack.c.l.b16 %v210
    %v247 = vunpack.c.l.b16 %v211
    %v248 = vunpack.c.l.b16 %v212
    %v249 = vpack.c.b16 %v234, %v233
    %v250 = vpack.c.b16 %v236, %v235
    %v251 = vpack.c.b16 %v238, %v237
    %v252 = vpack.c.b16 %v240, %v239
    %v253 = vpack.c.b16 %v242, %v241
    %v254 = vpack.c.b16 %v244, %v243
    %v255 = vpack.c.b16 %v246, %v245
    %v256 = vpack.c.b16 %v248, %v247
    %265 = vmatpush.bf16.msra.mxu0 %v256
    %266 = vmatpush.bf16.msra.mxu0 %v255
    %267 = vmatpush.bf16.msra.mxu0 %v254
    %268 = vmatpush.bf16.msra.mxu0 %v253
    %269 = vmatpush.bf16.msra.mxu0 %v252
    %270 = vmatpush.bf16.msra.mxu0 %v251
    %271 = vmatpush.bf16.msra.mxu0 %v250
    %272 = vmatpush.bf16.msra.mxu0 %v249
    %273 = vmatmul.bf16.gmra.mxu0 %v196
    %v274 = vpop.f32.mrf.mxu0
    %v275 = vadd.f32 %v215, %v274
    %v276 = vpop.f32.mrf.mxu0
    %277 = vdwg.mxu0
    %278 = vst [vmem:[%s6] sm:$0xff] %v275
  $region33: #{graph_encoder.13} parent=0 // pred_fallthru
    _
  // Predicated region
  $region34: #{graph_encoder.13} parent=0 // pred_check
    _
  $region35: #{graph_encoder.13} parent=0 // pred_check_branch
    %280 = sbr.rel (0) target = $region37
  $region36: #{graph_encoder.13} parent=0 // pred_region
    _
  $region37: #{graph_encoder.13} parent=0 // pred_fallthru
    _
  // Predicated region
  $region38: #{graph_encoder.13} parent=0 // pred_check
    _
  $region39: #{graph_encoder.13} parent=0 // pred_check_branch
    %282 = sbr.rel (0) target = $region41
  $region40: #{graph_encoder.13} parent=0 // pred_region
    _
  $region41: #{graph_encoder.13} parent=0 // pred_fallthru
    _

</llo_original>
